<compile_context>
chip_gen: v7x
topology: tpu7x:2x2x1
jax: 0.10.0
libtpu: 0.0.40
codegen_flags: <defaults>
</compile_context>

<pallas_src>
import functools

import jax
import jax.numpy as jnp
from jax.experimental import pallas as pl
from jax.experimental.pallas import tpu as pltpu


# ----------------------------- in-kernel helpers -----------------------------

def _layernorm(x, g, b, eps=1e-5):
    mu = jnp.mean(x, axis=-1, keepdims=True)
    var = jnp.mean(jnp.square(x - mu), axis=-1, keepdims=True)
    return (x - mu) * jax.lax.rsqrt(var + eps) * g + b


def _silu(x):
    # Swish(inplace=True) == x * sigmoid(x).  approx=False keeps exact f32 numerics
    # (approx=True would use the EUP vrcp slot but perturbs results vs the reference).
    return x * pl.reciprocal(1.0 + jnp.exp(-x), approx=False)


def _mlp(x, w1, b1, w2, b2):
    # Linear -> Swish -> Dropout(identity, eval) -> Linear
    h = _silu(jnp.dot(x, w1, preferred_element_type=jnp.float32) + b1)
    return jnp.dot(h, w2, preferred_element_type=jnp.float32) + b2


# --------------------------------- kernel ------------------------------------

def _net_kernel(meta, batch, seq_len,
                x1_ref, ix_ref, slab_ref,
                o1_ref, o2_ref):
    """Whole forward pass in one invocation (batch folded).

    x1_ref  : (B*S, D) flat, rows ordered (batch, token)
    ix_ref  : (B*N, D) flat inner tokens, N = S - 1
    slab_ref: packed parameter slab.  block_channel_mix / channel_mix weights are
              pre-expanded to block-diagonal form so the token-axis mixes become
              single transposed 2-D MXU matmuls over all batches/chunks at once.
    """
    def P(name):
        off, r, c = meta[name]
        return slab_ref[off:off + r, 0:c]          # static, 8-row-aligned slice (VMEM load)

    n_inner = seq_len - 1
    ix = ix_ref[...]                               # (B*N, D)

    # ---- block_token_mix: LayerNorm + MLP over features (per-token) ----
    y = _layernorm(ix, P("btm_g"), P("btm_b"))
    y = _mlp(y, P("bt_w1"), P("bt_b1"), P("bt_w2"), P("bt_b2"))

    # ---- block_channel_mix: mix the cl tokens inside each chunk ----
    # One transpose + two 2-D matmuls with (batch x chunk) block-diagonal weights
    # replace the per-chunk python loop / tiny transposes / concatenate.
    yT = y.T                                                               # (D, B*N)
    h = _silu(jnp.dot(yT, P("bc_w1"), preferred_element_type=jnp.float32) + P("bc_b1"))
    zT = jnp.dot(h, P("bc_w2"), preferred_element_type=jnp.float32) + P("bc_b2")
    x2 = ix + zT.T                                                         # (B*N, D)
    o2_ref[...] = x2

    # ---- projection bridge: LN2(LN1(x2) @ Wproj) ----
    p = _layernorm(x2, P("pn1_g"), P("pn1_b"))
    p = jnp.dot(p, P("pw"), preferred_element_type=jnp.float32)
    p = _layernorm(p, P("pn2_g"), P("pn2_b"))

    # x = cat(x1[:, :1], x1[:, 1:] + p) -- written as direct row-range stores into o1
    # (used as the staging buffer for x) instead of a concat + offset slice.
    for b in range(batch):                         # static unroll; batch already folded
        r0 = b * seq_len
        o1_ref[r0:r0 + 1, :] = x1_ref[r0:r0 + 1, :]
        o1_ref[r0 + 1:r0 + seq_len, :] = (
            x1_ref[r0 + 1:r0 + seq_len, :] + p[b * n_inner:(b + 1) * n_inner, :])
    x = o1_ref[...]                                # (B*S, D) == shortcut

    # ---- token_mix: LayerNorm + MLP over features ----
    t = _layernorm(x, P("tm_g"), P("tm_b"))
    t = _mlp(t, P("t_w1"), P("t_b1"), P("t_w2"), P("t_b2"))

    # ---- channel_mix: mix the S tokens of each batch (block-diagonal over batch) ----
    tT = t.T                                                               # (D, B*S)
    h2 = _silu(jnp.dot(tT, P("c_w1"), preferred_element_type=jnp.float32) + P("c_b1"))
    cT = jnp.dot(h2, P("c_w2"), preferred_element_type=jnp.float32) + P("c_b2")
    o1_ref[...] = cT.T + x


# ------------------------------ host-side packing -----------------------------

def _pack_params(named):
    """Pack small 2-D f32 params into one (rows, max_cols) slab (one DMA total).

    Every piece is padded to a multiple of 8 rows so the in-kernel slices are
    sublane aligned.  Returns (slab, meta) with meta[name] = (row_offset, rows, cols).
    """
    arrs = {}
    for k, v in named.items():
        a = jnp.asarray(v, jnp.float32)
        if a.ndim == 1:
            a = a[None, :]
        arrs[k] = a
    maxc = max(int(a.shape[1]) for a in arrs.values())
    pieces, meta, off = [], {}, 0
    for k, a in arrs.items():
        r, c = int(a.shape[0]), int(a.shape[1])
        rpad = (-r) % 8
        pieces.append(jnp.pad(a, ((0, rpad), (0, maxc - c))))
        meta[k] = (off, r, c)
        off += r + rpad
    return jnp.concatenate(pieces, axis=0), meta


# --------------------------------- wrapper -----------------------------------

def net_forward(x1, inner_x, params, seq_inner_num):
    B, S, D = x1.shape
    N = S - 1
    assert inner_x.shape == (B, N, D)

    (btm_g, btm_b, bt_w1, bt_b1, bt_w2, bt_b2,
     bc_w1, bc_b1, bc_w2, bc_b2,
     pn1_g, pn1_b, pw, pn2_g, pn2_b,
     tm_g, tm_b, t_w1, t_b1, t_w2, t_b2,
     c_w1, c_b1, c_w2, c_b2) = params

    f32 = jnp.float32
    eye_bc = jnp.eye(B * seq_inner_num, dtype=f32)    # one block per (batch, chunk)
    eye_b = jnp.eye(B, dtype=f32)                     # one block per batch

    named = {
        "btm_g": btm_g, "btm_b": btm_b,
        "bt_w1": bt_w1, "bt_b1": bt_b1, "bt_w2": bt_w2, "bt_b2": bt_b2,
        # block_channel_mix MLP expanded to block-diagonal over (batch, chunk): the
        # kernel then handles every chunk of every sample with one transposed matmul.
        "bc_w1": jnp.kron(eye_bc, jnp.asarray(bc_w1, f32)),
        "bc_b1": jnp.tile(jnp.asarray(bc_b1, f32).reshape(1, -1), (1, B * seq_inner_num)),
        "bc_w2": jnp.kron(eye_bc, jnp.asarray(bc_w2, f32)),
        "bc_b2": jnp.tile(jnp.asarray(bc_b2, f32).reshape(1, -1), (1, B * seq_inner_num)),
        "pn1_g": pn1_g, "pn1_b": pn1_b, "pw": pw, "pn2_g": pn2_g, "pn2_b": pn2_b,
        "tm_g": tm_g, "tm_b": tm_b,
        "t_w1": t_w1, "t_b1": t_b1, "t_w2": t_w2, "t_b2": t_b2,
        # channel_mix MLP expanded to block-diagonal over batch.
        "c_w1": jnp.kron(eye_b, jnp.asarray(c_w1, f32)),
        "c_b1": jnp.tile(jnp.asarray(c_b1, f32).reshape(1, -1), (1, B)),
        "c_w2": jnp.kron(eye_b, jnp.asarray(c_w2, f32)),
        "c_b2": jnp.tile(jnp.asarray(c_b2, f32).reshape(1, -1), (1, B)),
    }
    slab, meta = _pack_params(named)

    # Flat "rows = (batch, token)" activations: batch folded into one block, one grid step.
    x1f = x1.reshape(B * S, D)
    ixf = inner_x.reshape(B * N, D)

    def full_spec(shape):
        nd = len(shape)
        return pl.BlockSpec(shape, lambda i, _nd=nd: (0,) * _nd)

    kernel = functools.partial(_net_kernel, meta, B, S)
    o1f, o2f = pl.pallas_call(
        kernel,
        grid=(1,),
        in_specs=[full_spec(x1f.shape), full_spec(ixf.shape), full_spec(slab.shape)],
        out_specs=(full_spec((B * S, D)), full_spec((B * N, D))),
        out_shape=(jax.ShapeDtypeStruct((B * S, D), x1.dtype),
                   jax.ShapeDtypeStruct((B * N, D), x1.dtype)),
        compiler_params=pltpu.CompilerParams(dimension_semantics=("arbitrary",)),
    )(x1f, ixf, slab)

    return o1f.reshape(B, S, D), o2f.reshape(B, N, D)


# ------------------------------ pure-JAX reference ----------------------------

def ref_forward(x1, inner_x, params, seq_inner_num):
    (btm_g, btm_b, bt_w1, bt_b1, bt_w2, bt_b2,
     bc_w1, bc_b1, bc_w2, bc_b2,
     pn1_g, pn1_b, pw, pn2_g, pn2_b,
     tm_g, tm_b, t_w1, t_b1, t_w2, t_b2,
     c_w1, c_b1, c_w2, c_b2) = params

    def ln(x, g, b, eps=1e-5):
        mu = jnp.mean(x, -1, keepdims=True)
        var = jnp.mean((x - mu) ** 2, -1, keepdims=True)
        return (x - mu) / jnp.sqrt(var + eps) * g + b

    def silu(x):
        return x * (1.0 / (1.0 + jnp.exp(-x)))

    def mlp(x, w1, b1, w2, b2):
        return silu(x @ w1 + b1) @ w2 + b2

    B, S, D = x1.shape
    N = S - 1
    cl = N // seq_inner_num

    y = mlp(ln(inner_x, btm_g, btm_b), bt_w1, bt_b1, bt_w2, bt_b2)
    chunks = []
    for i in range(seq_inner_num):
        yc = jnp.swapaxes(y[:, i * cl:(i + 1) * cl, :], 1, 2)
        yc = mlp(yc, bc_w1, bc_b1, bc_w2, bc_b2)
        chunks.append(jnp.swapaxes(yc, 1, 2))
    x2 = inner_x + jnp.concatenate(chunks, axis=1)

    p = ln(ln(x2, pn1_g, pn1_b) @ pw, pn2_g, pn2_b)
    temp = x1[:, 1:, :] + p
    x = jnp.concatenate([x1[:, :1, :], temp], axis=1)
    shortcut = x
    t = mlp(ln(x, tm_g, tm_b), t_w1, t_b1, t_w2, t_b2)
    c = mlp(jnp.swapaxes(t, 1, 2), c_w1, c_b1, c_w2, c_b2)
    return jnp.swapaxes(c, 1, 2) + shortcut, x2


# --------------------------------- main ---------------------------------------

if __name__ == "__main__":
    # Shapes consistent with the module:
    #   dim=32, seq_len=9 (inner seq N=8), token_dim=32, channel_dim=16, seq_inner_num=2
    B, dim, seq_len = 2, 32, 9
    token_dim, channel_dim, seq_inner_num = 32, 16, 2
    N = seq_len - 1
    cl = N // seq_inner_num                 # 4
    ch_si = channel_dim // seq_inner_num    # 8

    key = jax.random.PRNGKey(0)
    keys = iter(jax.random.split(key, 32))

    def w(shape, scale=0.05):
        return (scale * jax.random.normal(next(keys), shape)).astype(jnp.float32)

    ones = lambda n: jnp.ones((1, n), jnp.float32)
    zeros = lambda n: jnp.zeros((1, n), jnp.float32)

    params = [
        # block_token_mix: LayerNorm(dim) + MLP(dim, token_dim)
        ones(dim), zeros(dim),
        w((dim, token_dim)), w((1, token_dim)), w((token_dim, dim)), w((1, dim)),
        # block_channel_mix: MLP((seq_len-1)//si, channel_dim//si)
        w((cl, ch_si)), w((1, ch_si)), w((ch_si, cl)), w((1, cl)),
        # proj_norm1, proj (no bias), proj_norm2
        ones(dim), zeros(dim), w((dim, dim)), ones(dim), zeros(dim),
        # token_mix: LayerNorm(dim) + MLP(dim, token_dim)
        ones(dim), zeros(dim),
        w((dim, token_dim)), w((1, token_dim)), w((token_dim, dim)), w((1, dim)),
        # channel_mix: MLP(seq_len, channel_dim)
        w((seq_len, channel_dim)), w((1, channel_dim)), w((channel_dim, seq_len)), w((1, seq_len)),
    ]

    x1 = jax.random.normal(next(keys), (B, seq_len, dim), jnp.float32)
    inner_x = jax.random.normal(next(keys), (B, N, dim), jnp.float32)

    out1, out2 = net_forward(x1, inner_x, params, seq_inner_num)
    jax.block_until_ready((out1, out2))

    ref1, ref2 = ref_forward(x1, inner_x, params, seq_inner_num)
    assert out1.shape == (B, seq_len, dim) and out2.shape == (B, N, dim)
    assert jnp.allclose(out1, ref1, atol=1e-4, rtol=1e-4), float(jnp.max(jnp.abs(out1 - ref1)))
    assert jnp.allclose(out2, ref2, atol=1e-4, rtol=1e-4), float(jnp.max(jnp.abs(out2 - ref2)))

    print("KERNEL_OK")
</pallas_src>

<mosaic_0001>
module attributes {stable_mosaic.version = 11 : i64} {
  func.func @_net_kernel(%arg0: i32, %arg1: memref<18x32xf32, #tpu.memory_space<vmem>>, %arg2: memref<16x32xf32, #tpu.memory_space<vmem>>, %arg3: memref<392x32xf32, #tpu.memory_space<vmem>>, %arg4: memref<18x32xf32, #tpu.memory_space<vmem>>, %arg5: memref<16x32xf32, #tpu.memory_space<vmem>>) attributes {dimension_semantics = [#tpu.dimension_semantics<arbitrary>], iteration_bounds = array<i64: 1>, scalar_prefetch = 0 : i64, scratch_operands = 0 : i64, tpu.core_type = #tpu.core_type<tc>, window_params = [{pipeline_mode = #tpu.pipeline_mode<synchronous>, transform_indices = @transform_0, window_bounds = array<i64: 18, 32>}, {pipeline_mode = #tpu.pipeline_mode<synchronous>, transform_indices = @transform_1, window_bounds = array<i64: 16, 32>}, {pipeline_mode = #tpu.pipeline_mode<synchronous>, transform_indices = @transform_2, window_bounds = array<i64: 392, 32>}, {pipeline_mode = #tpu.pipeline_mode<synchronous>, transform_indices = @transform_3, window_bounds = array<i64: 18, 32>}, {pipeline_mode = #tpu.pipeline_mode<synchronous>, transform_indices = @transform_4, window_bounds = array<i64: 16, 32>}]} {
    %c0 = arith.constant 0 : index
    %c0_0 = arith.constant 0 : index
    %0 = vector.load %arg2[%c0, %c0_0] : memref<16x32xf32, #tpu.memory_space<vmem>>, vector<16x32xf32>
    %c0_1 = arith.constant 0 : index
    %c0_2 = arith.constant 0 : index
    %1 = vector.load %arg3[%c0_1, %c0_2] : memref<392x32xf32, #tpu.memory_space<vmem>>, vector<1x32xf32>
    %c8 = arith.constant 8 : index
    %c0_3 = arith.constant 0 : index
    %2 = vector.load %arg3[%c8, %c0_3] : memref<392x32xf32, #tpu.memory_space<vmem>>, vector<1x32xf32>
    %cst = arith.constant dense<0.000000e+00> : vector<16xf32>
    %3 = vector.multi_reduction <add>, %0, %cst [1] : vector<16x32xf32> to vector<16xf32>
    %4 = vector.shape_cast %3 : vector<16xf32> to vector<16x1xf32>
    %cst_4 = arith.constant 3.200000e+01 : f32
    %5 = vector.broadcast %cst_4 : f32 to vector<16x1xf32>
    %6 = arith.divf %4, %5 : vector<16x1xf32>
    %7 = vector.broadcast %6 : vector<16x1xf32> to vector<16x32xf32>
    %8 = arith.subf %0, %7 : vector<16x32xf32>
    %9 = arith.mulf %8, %8 : vector<16x32xf32>
    %cst_5 = arith.constant dense<0.000000e+00> : vector<16xf32>
    %10 = vector.multi_reduction <add>, %9, %cst_5 [1] : vector<16x32xf32> to vector<16xf32>
    %11 = vector.shape_cast %10 : vector<16xf32> to vector<16x1xf32>
    %cst_6 = arith.constant 3.200000e+01 : f32
    %12 = vector.broadcast %cst_6 : f32 to vector<16x1xf32>
    %13 = arith.divf %11, %12 : vector<16x1xf32>
    %14 = vector.broadcast %6 : vector<16x1xf32> to vector<16x32xf32>
    %15 = arith.subf %0, %14 : vector<16x32xf32>
    %cst_7 = arith.constant 9.99999974E-6 : f32
    %16 = vector.broadcast %cst_7 : f32 to vector<16x1xf32>
    %17 = arith.addf %13, %16 : vector<16x1xf32>
    %18 = math.rsqrt %17 : vector<16x1xf32>
    %19 = vector.broadcast %18 : vector<16x1xf32> to vector<16x32xf32>
    %20 = arith.mulf %15, %19 : vector<16x32xf32>
    %21 = vector.broadcast %1 : vector<1x32xf32> to vector<16x32xf32>
    %22 = arith.mulf %20, %21 : vector<16x32xf32>
    %23 = vector.broadcast %2 : vector<1x32xf32> to vector<16x32xf32>
    %24 = arith.addf %22, %23 : vector<16x32xf32>
    %c16 = arith.constant 16 : index
    %c0_8 = arith.constant 0 : index
    %25 = vector.load %arg3[%c16, %c0_8] : memref<392x32xf32, #tpu.memory_space<vmem>>, vector<32x32xf32>
    %c48 = arith.constant 48 : index
    %c0_9 = arith.constant 0 : index
    %26 = vector.load %arg3[%c48, %c0_9] : memref<392x32xf32, #tpu.memory_space<vmem>>, vector<1x32xf32>
    %c56 = arith.constant 56 : index
    %c0_10 = arith.constant 0 : index
    %27 = vector.load %arg3[%c56, %c0_10] : memref<392x32xf32, #tpu.memory_space<vmem>>, vector<32x32xf32>
    %c88 = arith.constant 88 : index
    %c0_11 = arith.constant 0 : index
    %28 = vector.load %arg3[%c88, %c0_11] : memref<392x32xf32, #tpu.memory_space<vmem>>, vector<1x32xf32>
    %cst_12 = arith.constant dense<0.000000e+00> : vector<16x32xf32>
    %29 = tpu.matmul %24, %25, %cst_12 {dimension_numbers = #tpu.dot_dimension_numbers<[1], [0], [0], [1], [0, 0, 1, 1], [], []>} : vector<16x32xf32>, vector<32x32xf32>, vector<16x32xf32> -> vector<16x32xf32>
    %30 = vector.broadcast %26 : vector<1x32xf32> to vector<16x32xf32>
    %31 = arith.addf %29, %30 : vector<16x32xf32>
    %cst_13 = arith.constant 0.000000e+00 : f32
    %32 = vector.broadcast %cst_13 : f32 to vector<16x32xf32>
    %33 = arith.subf %32, %31 : vector<16x32xf32>
    %34 = math.exp %33 : vector<16x32xf32>
    %cst_14 = arith.constant 1.000000e+00 : f32
    %35 = vector.broadcast %cst_14 : f32 to vector<16x32xf32>
    %36 = arith.addf %35, %34 : vector<16x32xf32>
    %37 = tpu.reciprocal %36 : vector<16x32xf32> -> vector<16x32xf32>
    %38 = arith.mulf %31, %37 : vector<16x32xf32>
    %cst_15 = arith.constant dense<0.000000e+00> : vector<16x32xf32>
    %39 = tpu.matmul %38, %27, %cst_15 {dimension_numbers = #tpu.dot_dimension_numbers<[1], [0], [0], [1], [0, 0, 1, 1], [], []>} : vector<16x32xf32>, vector<32x32xf32>, vector<16x32xf32> -> vector<16x32xf32>
    %40 = vector.broadcast %28 : vector<1x32xf32> to vector<16x32xf32>
    %41 = arith.addf %39, %40 : vector<16x32xf32>
    %42 = tpu.transpose %41, [1, 0] : vector<16x32xf32> -> vector<32x16xf32>
    %c96 = arith.constant 96 : index
    %c0_16 = arith.constant 0 : index
    %43 = vector.load %arg3[%c96, %c0_16] : memref<392x32xf32, #tpu.memory_space<vmem>>, vector<16x32xf32>
    %cst_17 = arith.constant dense<0.000000e+00> : vector<32x32xf32>
    %44 = tpu.matmul %42, %43, %cst_17 {dimension_numbers = #tpu.dot_dimension_numbers<[1], [0], [0], [1], [0, 0, 1, 1], [], []>} : vector<32x16xf32>, vector<16x32xf32>, vector<32x32xf32> -> vector<32x32xf32>
    %c112 = arith.constant 112 : index
    %c0_18 = arith.constant 0 : index
    %45 = vector.load %arg3[%c112, %c0_18] : memref<392x32xf32, #tpu.memory_space<vmem>>, vector<1x32xf32>
    %46 = vector.broadcast %45 : vector<1x32xf32> to vector<32x32xf32>
    %47 = arith.addf %44, %46 : vector<32x32xf32>
    %cst_19 = arith.constant 0.000000e+00 : f32
    %48 = vector.broadcast %cst_19 : f32 to vector<32x32xf32>
    %49 = arith.subf %48, %47 : vector<32x32xf32>
    %50 = math.exp %49 : vector<32x32xf32>
    %cst_20 = arith.constant 1.000000e+00 : f32
    %51 = vector.broadcast %cst_20 : f32 to vector<32x32xf32>
    %52 = arith.addf %51, %50 : vector<32x32xf32>
    %53 = tpu.reciprocal %52 : vector<32x32xf32> -> vector<32x32xf32>
    %54 = arith.mulf %47, %53 : vector<32x32xf32>
    %c120 = arith.constant 120 : index
    %c0_21 = arith.constant 0 : index
    %55 = vector.load %arg3[%c120, %c0_21] : memref<392x32xf32, #tpu.memory_space<vmem>>, vector<32x16xf32>
    %cst_22 = arith.constant dense<0.000000e+00> : vector<32x16xf32>
    %56 = tpu.matmul %54, %55, %cst_22 {dimension_numbers = #tpu.dot_dimension_numbers<[1], [0], [0], [1], [0, 0, 1, 1], [], []>} : vector<32x32xf32>, vector<32x16xf32>, vector<32x16xf32> -> vector<32x16xf32>
    %c152 = arith.constant 152 : index
    %c0_23 = arith.constant 0 : index
    %57 = vector.load %arg3[%c152, %c0_23] : memref<392x32xf32, #tpu.memory_space<vmem>>, vector<1x16xf32>
    %58 = vector.broadcast %57 : vector<1x16xf32> to vector<32x16xf32>
    %59 = arith.addf %56, %58 : vector<32x16xf32>
    %60 = tpu.transpose %59, [1, 0] : vector<32x16xf32> -> vector<16x32xf32>
    %61 = arith.addf %0, %60 : vector<16x32xf32>
    %c0_24 = arith.constant 0 : index
    %c0_25 = arith.constant 0 : index
    %62 = vector.load %arg5[%c0_24, %c0_25] : memref<16x32xf32, #tpu.memory_space<vmem>>, vector<16x32xf32>
    tpu.vector_store %arg5[%c0_24, %c0_25], %61 {strides = array<i32>} : memref<16x32xf32, #tpu.memory_space<vmem>>, vector<16x32xf32>,
    %c160 = arith.constant 160 : index
    %c0_26 = arith.constant 0 : index
    %63 = vector.load %arg3[%c160, %c0_26] : memref<392x32xf32, #tpu.memory_space<vmem>>, vector<1x32xf32>
    %c168 = arith.constant 168 : index
    %c0_27 = arith.constant 0 : index
    %64 = vector.load %arg3[%c168, %c0_27] : memref<392x32xf32, #tpu.memory_space<vmem>>, vector<1x32xf32>
    %cst_28 = arith.constant dense<0.000000e+00> : vector<16xf32>
    %65 = vector.multi_reduction <add>, %61, %cst_28 [1] : vector<16x32xf32> to vector<16xf32>
    %66 = vector.shape_cast %65 : vector<16xf32> to vector<16x1xf32>
    %cst_29 = arith.constant 3.200000e+01 : f32
    %67 = vector.broadcast %cst_29 : f32 to vector<16x1xf32>
    %68 = arith.divf %66, %67 : vector<16x1xf32>
    %69 = vector.broadcast %68 : vector<16x1xf32> to vector<16x32xf32>
    %70 = arith.subf %61, %69 : vector<16x32xf32>
    %71 = arith.mulf %70, %70 : vector<16x32xf32>
    %cst_30 = arith.constant dense<0.000000e+00> : vector<16xf32>
    %72 = vector.multi_reduction <add>, %71, %cst_30 [1] : vector<16x32xf32> to vector<16xf32>
    %73 = vector.shape_cast %72 : vector<16xf32> to vector<16x1xf32>
    %cst_31 = arith.constant 3.200000e+01 : f32
    %74 = vector.broadcast %cst_31 : f32 to vector<16x1xf32>
    %75 = arith.divf %73, %74 : vector<16x1xf32>
    %76 = vector.broadcast %68 : vector<16x1xf32> to vector<16x32xf32>
    %77 = arith.subf %61, %76 : vector<16x32xf32>
    %cst_32 = arith.constant 9.99999974E-6 : f32
    %78 = vector.broadcast %cst_32 : f32 to vector<16x1xf32>
    %79 = arith.addf %75, %78 : vector<16x1xf32>
    %80 = math.rsqrt %79 : vector<16x1xf32>
    %81 = vector.broadcast %80 : vector<16x1xf32> to vector<16x32xf32>
    %82 = arith.mulf %77, %81 : vector<16x32xf32>
    %83 = vector.broadcast %63 : vector<1x32xf32> to vector<16x32xf32>
    %84 = arith.mulf %82, %83 : vector<16x32xf32>
    %85 = vector.broadcast %64 : vector<1x32xf32> to vector<16x32xf32>
    %86 = arith.addf %84, %85 : vector<16x32xf32>
    %c176 = arith.constant 176 : index
    %c0_33 = arith.constant 0 : index
    %87 = vector.load %arg3[%c176, %c0_33] : memref<392x32xf32, #tpu.memory_space<vmem>>, vector<32x32xf32>
    %cst_34 = arith.constant dense<0.000000e+00> : vector<16x32xf32>
    %88 = tpu.matmul %86, %87, %cst_34 {dimension_numbers = #tpu.dot_dimension_numbers<[1], [0], [0], [1], [0, 0, 1, 1], [], []>} : vector<16x32xf32>, vector<32x32xf32>, vector<16x32xf32> -> vector<16x32xf32>
    %c208 = arith.constant 208 : index
    %c0_35 = arith.constant 0 : index
    %89 = vector.load %arg3[%c208, %c0_35] : memref<392x32xf32, #tpu.memory_space<vmem>>, vector<1x32xf32>
    %c216 = arith.constant 216 : index
    %c0_36 = arith.constant 0 : index
    %90 = vector.load %arg3[%c216, %c0_36] : memref<392x32xf32, #tpu.memory_space<vmem>>, vector<1x32xf32>
    %cst_37 = arith.constant dense<0.000000e+00> : vector<16xf32>
    %91 = vector.multi_reduction <add>, %88, %cst_37 [1] : vector<16x32xf32> to vector<16xf32>
    %92 = vector.shape_cast %91 : vector<16xf32> to vector<16x1xf32>
    %cst_38 = arith.constant 3.200000e+01 : f32
    %93 = vector.broadcast %cst_38 : f32 to vector<16x1xf32>
    %94 = arith.divf %92, %93 : vector<16x1xf32>
    %95 = vector.broadcast %94 : vector<16x1xf32> to vector<16x32xf32>
    %96 = arith.subf %88, %95 : vector<16x32xf32>
    %97 = arith.mulf %96, %96 : vector<16x32xf32>
    %cst_39 = arith.constant dense<0.000000e+00> : vector<16xf32>
    %98 = vector.multi_reduction <add>, %97, %cst_39 [1] : vector<16x32xf32> to vector<16xf32>
    %99 = vector.shape_cast %98 : vector<16xf32> to vector<16x1xf32>
    %cst_40 = arith.constant 3.200000e+01 : f32
    %100 = vector.broadcast %cst_40 : f32 to vector<16x1xf32>
    %101 = arith.divf %99, %100 : vector<16x1xf32>
    %102 = vector.broadcast %94 : vector<16x1xf32> to vector<16x32xf32>
    %103 = arith.subf %88, %102 : vector<16x32xf32>
    %cst_41 = arith.constant 9.99999974E-6 : f32
    %104 = vector.broadcast %cst_41 : f32 to vector<16x1xf32>
    %105 = arith.addf %101, %104 : vector<16x1xf32>
    %106 = math.rsqrt %105 : vector<16x1xf32>
    %107 = vector.broadcast %106 : vector<16x1xf32> to vector<16x32xf32>
    %108 = arith.mulf %103, %107 : vector<16x32xf32>
    %109 = vector.broadcast %89 : vector<1x32xf32> to vector<16x32xf32>
    %110 = arith.mulf %108, %109 : vector<16x32xf32>
    %111 = vector.broadcast %90 : vector<1x32xf32> to vector<16x32xf32>
    %112 = arith.addf %110, %111 : vector<16x32xf32>
    %c0_42 = arith.constant 0 : index
    %c0_43 = arith.constant 0 : index
    %113 = vector.load %arg1[%c0_42, %c0_43] : memref<18x32xf32, #tpu.memory_space<vmem>>, vector<1x32xf32>
    %c0_44 = arith.constant 0 : index
    %c0_45 = arith.constant 0 : index
    %114 = vector.load %arg4[%c0_44, %c0_45] : memref<18x32xf32, #tpu.memory_space<vmem>>, vector<1x32xf32>
    tpu.vector_store %arg4[%c0_44, %c0_45], %113 {strides = array<i32>} : memref<18x32xf32, #tpu.memory_space<vmem>>, vector<1x32xf32>,
    %c1 = arith.constant 1 : index
    %c0_46 = arith.constant 0 : index
    %115 = vector.load %arg1[%c1, %c0_46] : memref<18x32xf32, #tpu.memory_space<vmem>>, vector<8x32xf32>
    %116 = vector.extract_strided_slice %112 {offsets = [0, 0], sizes = [8, 32], strides = [1, 1]} : vector<16x32xf32> to vector<8x32xf32>
    %117 = arith.addf %115, %116 : vector<8x32xf32>
    %c1_47 = arith.constant 1 : index
    %c0_48 = arith.constant 0 : index
    %118 = vector.load %arg4[%c1_47, %c0_48] : memref<18x32xf32, #tpu.memory_space<vmem>>, vector<8x32xf32>
    tpu.vector_store %arg4[%c1_47, %c0_48], %117 {strides = array<i32>} : memref<18x32xf32, #tpu.memory_space<vmem>>, vector<8x32xf32>,
    %c9 = arith.constant 9 : index
    %c0_49 = arith.constant 0 : index
    %119 = vector.load %arg1[%c9, %c0_49] : memref<18x32xf32, #tpu.memory_space<vmem>>, vector<1x32xf32>
    %c9_50 = arith.constant 9 : index
    %c0_51 = arith.constant 0 : index
    %120 = vector.load %arg4[%c9_50, %c0_51] : memref<18x32xf32, #tpu.memory_space<vmem>>, vector<1x32xf32>
    tpu.vector_store %arg4[%c9_50, %c0_51], %119 {strides = array<i32>} : memref<18x32xf32, #tpu.memory_space<vmem>>, vector<1x32xf32>,
    %c10 = arith.constant 10 : index
    %c0_52 = arith.constant 0 : index
    %121 = vector.load %arg1[%c10, %c0_52] : memref<18x32xf32, #tpu.memory_space<vmem>>, vector<8x32xf32>
    %122 = vector.extract_strided_slice %112 {offsets = [8, 0], sizes = [8, 32], strides = [1, 1]} : vector<16x32xf32> to vector<8x32xf32>
    %123 = arith.addf %121, %122 : vector<8x32xf32>
    %c10_53 = arith.constant 10 : index
    %c0_54 = arith.constant 0 : index
    %124 = vector.load %arg4[%c10_53, %c0_54] : memref<18x32xf32, #tpu.memory_space<vmem>>, vector<8x32xf32>
    tpu.vector_store %arg4[%c10_53, %c0_54], %123 {strides = array<i32>} : memref<18x32xf32, #tpu.memory_space<vmem>>, vector<8x32xf32>,
    %c0_55 = arith.constant 0 : index
    %c0_56 = arith.constant 0 : index
    %125 = vector.load %arg4[%c0_55, %c0_56] : memref<18x32xf32, #tpu.memory_space<vmem>>, vector<18x32xf32>
    %c224 = arith.constant 224 : index
    %c0_57 = arith.constant 0 : index
    %126 = vector.load %arg3[%c224, %c0_57] : memref<392x32xf32, #tpu.memory_space<vmem>>, vector<1x32xf32>
    %c232 = arith.constant 232 : index
    %c0_58 = arith.constant 0 : index
    %127 = vector.load %arg3[%c232, %c0_58] : memref<392x32xf32, #tpu.memory_space<vmem>>, vector<1x32xf32>
    %cst_59 = arith.constant dense<0.000000e+00> : vector<18xf32>
    %128 = vector.multi_reduction <add>, %125, %cst_59 [1] : vector<18x32xf32> to vector<18xf32>
    %129 = vector.shape_cast %128 : vector<18xf32> to vector<18x1xf32>
    %cst_60 = arith.constant 3.200000e+01 : f32
    %130 = vector.broadcast %cst_60 : f32 to vector<18x1xf32>
    %131 = arith.divf %129, %130 : vector<18x1xf32>
    %132 = vector.broadcast %131 : vector<18x1xf32> to vector<18x32xf32>
    %133 = arith.subf %125, %132 : vector<18x32xf32>
    %134 = arith.mulf %133, %133 : vector<18x32xf32>
    %cst_61 = arith.constant dense<0.000000e+00> : vector<18xf32>
    %135 = vector.multi_reduction <add>, %134, %cst_61 [1] : vector<18x32xf32> to vector<18xf32>
    %136 = vector.shape_cast %135 : vector<18xf32> to vector<18x1xf32>
    %cst_62 = arith.constant 3.200000e+01 : f32
    %137 = vector.broadcast %cst_62 : f32 to vector<18x1xf32>
    %138 = arith.divf %136, %137 : vector<18x1xf32>
    %139 = vector.broadcast %131 : vector<18x1xf32> to vector<18x32xf32>
    %140 = arith.subf %125, %139 : vector<18x32xf32>
    %cst_63 = arith.constant 9.99999974E-6 : f32
    %141 = vector.broadcast %cst_63 : f32 to vector<18x1xf32>
    %142 = arith.addf %138, %141 : vector<18x1xf32>
    %143 = math.rsqrt %142 : vector<18x1xf32>
    %144 = vector.broadcast %143 : vector<18x1xf32> to vector<18x32xf32>
    %145 = arith.mulf %140, %144 : vector<18x32xf32>
    %146 = vector.broadcast %126 : vector<1x32xf32> to vector<18x32xf32>
    %147 = arith.mulf %145, %146 : vector<18x32xf32>
    %148 = vector.broadcast %127 : vector<1x32xf32> to vector<18x32xf32>
    %149 = arith.addf %147, %148 : vector<18x32xf32>
    %c240 = arith.constant 240 : index
    %c0_64 = arith.constant 0 : index
    %150 = vector.load %arg3[%c240, %c0_64] : memref<392x32xf32, #tpu.memory_space<vmem>>, vector<32x32xf32>
    %c272 = arith.constant 272 : index
    %c0_65 = arith.constant 0 : index
    %151 = vector.load %arg3[%c272, %c0_65] : memref<392x32xf32, #tpu.memory_space<vmem>>, vector<1x32xf32>
    %c280 = arith.constant 280 : index
    %c0_66 = arith.constant 0 : index
    %152 = vector.load %arg3[%c280, %c0_66] : memref<392x32xf32, #tpu.memory_space<vmem>>, vector<32x32xf32>
    %c312 = arith.constant 312 : index
    %c0_67 = arith.constant 0 : index
    %153 = vector.load %arg3[%c312, %c0_67] : memref<392x32xf32, #tpu.memory_space<vmem>>, vector<1x32xf32>
    %cst_68 = arith.constant dense<0.000000e+00> : vector<18x32xf32>
    %154 = tpu.matmul %149, %150, %cst_68 {dimension_numbers = #tpu.dot_dimension_numbers<[1], [0], [0], [1], [0, 0, 1, 1], [], []>} : vector<18x32xf32>, vector<32x32xf32>, vector<18x32xf32> -> vector<18x32xf32>
    %155 = vector.broadcast %151 : vector<1x32xf32> to vector<18x32xf32>
    %156 = arith.addf %154, %155 : vector<18x32xf32>
    %cst_69 = arith.constant 0.000000e+00 : f32
    %157 = vector.broadcast %cst_69 : f32 to vector<18x32xf32>
    %158 = arith.subf %157, %156 : vector<18x32xf32>
    %159 = math.exp %158 : vector<18x32xf32>
    %cst_70 = arith.constant 1.000000e+00 : f32
    %160 = vector.broadcast %cst_70 : f32 to vector<18x32xf32>
    %161 = arith.addf %160, %159 : vector<18x32xf32>
    %162 = tpu.reciprocal %161 : vector<18x32xf32> -> vector<18x32xf32>
    %163 = arith.mulf %156, %162 : vector<18x32xf32>
    %cst_71 = arith.constant dense<0.000000e+00> : vector<18x32xf32>
    %164 = tpu.matmul %163, %152, %cst_71 {dimension_numbers = #tpu.dot_dimension_numbers<[1], [0], [0], [1], [0, 0, 1, 1], [], []>} : vector<18x32xf32>, vector<32x32xf32>, vector<18x32xf32> -> vector<18x32xf32>
    %165 = vector.broadcast %153 : vector<1x32xf32> to vector<18x32xf32>
    %166 = arith.addf %164, %165 : vector<18x32xf32>
    %167 = tpu.transpose %166, [1, 0] : vector<18x32xf32> -> vector<32x18xf32>
    %c320 = arith.constant 320 : index
    %c0_72 = arith.constant 0 : index
    %168 = vector.load %arg3[%c320, %c0_72] : memref<392x32xf32, #tpu.memory_space<vmem>>, vector<18x32xf32>
    %cst_73 = arith.constant dense<0.000000e+00> : vector<32x32xf32>
    %169 = tpu.matmul %167, %168, %cst_73 {dimension_numbers = #tpu.dot_dimension_numbers<[1], [0], [0], [1], [0, 0, 1, 1], [], []>} : vector<32x18xf32>, vector<18x32xf32>, vector<32x32xf32> -> vector<32x32xf32>
    %c344 = arith.constant 344 : index
    %c0_74 = arith.constant 0 : index
    %170 = vector.load %arg3[%c344, %c0_74] : memref<392x32xf32, #tpu.memory_space<vmem>>, vector<1x32xf32>
    %171 = vector.broadcast %170 : vector<1x32xf32> to vector<32x32xf32>
    %172 = arith.addf %169, %171 : vector<32x32xf32>
    %cst_75 = arith.constant 0.000000e+00 : f32
    %173 = vector.broadcast %cst_75 : f32 to vector<32x32xf32>
    %174 = arith.subf %173, %172 : vector<32x32xf32>
    %175 = math.exp %174 : vector<32x32xf32>
    %cst_76 = arith.constant 1.000000e+00 : f32
    %176 = vector.broadcast %cst_76 : f32 to vector<32x32xf32>
    %177 = arith.addf %176, %175 : vector<32x32xf32>
    %178 = tpu.reciprocal %177 : vector<32x32xf32> -> vector<32x32xf32>
    %179 = arith.mulf %172, %178 : vector<32x32xf32>
    %c352 = arith.constant 352 : index
    %c0_77 = arith.constant 0 : index
    %180 = vector.load %arg3[%c352, %c0_77] : memref<392x32xf32, #tpu.memory_space<vmem>>, vector<32x18xf32>
    %cst_78 = arith.constant dense<0.000000e+00> : vector<32x18xf32>
    %181 = tpu.matmul %179, %180, %cst_78 {dimension_numbers = #tpu.dot_dimension_numbers<[1], [0], [0], [1], [0, 0, 1, 1], [], []>} : vector<32x32xf32>, vector<32x18xf32>, vector<32x18xf32> -> vector<32x18xf32>
    %c384 = arith.constant 384 : index
    %c0_79 = arith.constant 0 : index
    %182 = vector.load %arg3[%c384, %c0_79] : memref<392x32xf32, #tpu.memory_space<vmem>>, vector<1x18xf32>
    %183 = vector.broadcast %182 : vector<1x18xf32> to vector<32x18xf32>
    %184 = arith.addf %181, %183 : vector<32x18xf32>
    %185 = tpu.transpose %184, [1, 0] : vector<32x18xf32> -> vector<18x32xf32>
    %186 = arith.addf %185, %125 : vector<18x32xf32>
    %c0_80 = arith.constant 0 : index
    %c0_81 = arith.constant 0 : index
    %187 = vector.load %arg4[%c0_80, %c0_81] : memref<18x32xf32, #tpu.memory_space<vmem>>, vector<18x32xf32>
    tpu.vector_store %arg4[%c0_80, %c0_81], %186 {strides = array<i32>} : memref<18x32xf32, #tpu.memory_space<vmem>>, vector<18x32xf32>,
    return
  }
  func.func @transform_0(%arg0: i32) -> (i32, i32) {
    %c0_i32 = arith.constant 0 : i32
    %c0_i32_0 = arith.constant 0 : i32
    %c0_i32_1 = arith.constant 0 : i32
    return %c0_i32, %c0_i32_0 : i32, i32
  }
  func.func @transform_1(%arg0: i32) -> (i32, i32) {
    %c0_i32 = arith.constant 0 : i32
    %c0_i32_0 = arith.constant 0 : i32
    %c0_i32_1 = arith.constant 0 : i32
    return %c0_i32, %c0_i32_0 : i32, i32
  }
  func.func @transform_2(%arg0: i32) -> (i32, i32) {
    %c0_i32 = arith.constant 0 : i32
    %c0_i32_0 = arith.constant 0 : i32
    %c0_i32_1 = arith.constant 0 : i32
    return %c0_i32, %c0_i32_0 : i32, i32
  }
  func.func @transform_3(%arg0: i32) -> (i32, i32) {
    %c0_i32 = arith.constant 0 : i32
    %c0_i32_0 = arith.constant 0 : i32
    %c0_i32_1 = arith.constant 0 : i32
    return %c0_i32, %c0_i32_0 : i32, i32
  }
  func.func @transform_4(%arg0: i32) -> (i32, i32) {
    %c0_i32 = arith.constant 0 : i32
    %c0_i32_0 = arith.constant 0 : i32
    %c0_i32_1 = arith.constant 0 : i32
    return %c0_i32, %c0_i32_0 : i32, i32
  }
}

</mosaic_0001>

<llo_original>
// kernel: tpu_custom_call.1
$region0: #{tpu_custom_call.1}
  #allocation0 [shape = 'u32[]', space=smem, size = 0x4, offset = 0x4, fixed_abs, tag = 'smem constant byte address 0x4 - core index']
  #allocation1 [shape = 'u32[144,128]{1,0:T(1,128)}', space=vmem, size = 0x12000, scoped, tag = 'internal scratch']
  %s0 = inlined_call_operand.vmem [shape: f32[18,32], index: 0, kind: input, shape index: {}]
  %s1 = inlined_call_operand.vmem [shape: f32[16,32], index: 1, kind: input, shape index: {}]
  %s2 = inlined_call_operand.vmem [shape: f32[392,32], index: 2, kind: input, shape index: {}]
  %s3 = inlined_call_operand.hbm [shape: f32[18,32], index: 3, kind: output, shape index: {0}]
  %s4 = inlined_call_operand.hbm [shape: f32[16,32], index: 4, kind: output, shape index: {1}]
  %5 = xla_tuple %s3, %s4
  %s6 = sld [smem:[#allocation0]]
  $region30: #{tpu_custom_call.1} parent=0
    _
  %s8 = ssub.s32 1, %s6
  %s9 = scalar_select 0, %s8, %s6
  $region1: #{tpu_custom_call.1} parent=0
    #allocation2 [shape = 'u8[12288]{0}', space=vmem, size = 0x3000, scoped, tag = 'output window, operand 0, single buffered']
    #allocation3 [shape = 's32[1]{0}', space=sflag, size = 0x4, scoped, tag = 'scoped memory for tpu_custom_call.1']
    #allocation4 [shape = 'u8[8192]{0}', space=vmem, size = 0x2000, scoped, tag = 'output window, operand 1, single buffered']
    #allocation5 [shape = 's32[1]{0}', space=sflag, size = 0x4, scoped, tag = 'scoped memory for tpu_custom_call.1']
    %10 = vsyncpa [#allocation3], 0
    %11 = vsyncpa [#allocation5], 0
    // Predicated region
    $region2: #{tpu_custom_call.1} parent=1 // pred_check
      _
    $region3: #{tpu_custom_call.1} parent=1 // pred_check_branch
      %13 = sbr.rel (0) target = $region5
    $region4: #{tpu_custom_call.1} parent=1 // pred_region
      _
    $region5: #{tpu_custom_call.1} parent=1 // pred_fallthru
      _
    // Predicated region
    $region6: #{tpu_custom_call.1} parent=1 // pred_check
      _
    $region7: #{tpu_custom_call.1} parent=1 // pred_check_branch
      %15 = sbr.rel (0) target = $region9
    $region8: #{tpu_custom_call.1} parent=1 // pred_region
      _
    $region9: #{tpu_custom_call.1} parent=1 // pred_fallthru
      _
    // Predicated region
    $region10: #{tpu_custom_call.1} parent=1 // pred_check
      _
    $region11: #{tpu_custom_call.1} parent=1 // pred_check_branch
      %17 = sbr.rel (0) target = $region13
    $region12: #{tpu_custom_call.1} parent=1 // pred_region
      _
    $region13: #{tpu_custom_call.1} parent=1 // pred_fallthru
      _
    %v18 = vld [vmem:[%s1] sm:$0xff]
    %v19 = vld [vmem:[%s1 + $0x8] sm:$0xff]
    %v20 = vld [vmem:[%s2] sm:$0x1]
    %v21 = vld [vmem:[%s2 + $0x8] sm:$0x1]
    %vm22 = vcmask 261120
    %v23 = vsel %vm22, %v18, 0.0
    %24 = vadd.xlane.f32.xlu0 %v23
    %v25 = vpop.xlane.xlu0 %24
    %v26 = vsel %vm22, %v19, 0.0
    %27 = vadd.xlane.f32.xlu0 %v26
    %v28 = vpop.xlane.xlu0 %27
    %v29 = vrcp.pop 32.0
    %v30 = vmul.f32 %v25, %v29
    %v31 = vmul.f32 %v28, %v29
    %v32 = vsub.f32 %v18, %v30
    %v33 = vsub.f32 %v19, %v31
    %v34 = vmul.f32 %v32, %v32
    %v35 = vmul.f32 %v33, %v33
    %v36 = vsel %vm22, %v34, 0.0
    %37 = vadd.xlane.f32.xlu0 %v36
    %v38 = vpop.xlane.xlu0 %37
    %v39 = vsel %vm22, %v35, 0.0
    %40 = vadd.xlane.f32.xlu0 %v39
    %v41 = vpop.xlane.xlu0 %40
    %v42 = vmul.f32 %v38, %v29
    %v43 = vmul.f32 %v41, %v29
    %v44 = vadd.f32 %v42, 1e-05
    %v45 = vadd.f32 %v43, 1e-05
    %v46 = vrsqrt.pop %v44
    %v47 = vrsqrt.pop %v45
    %v48 = vmul.f32 %v32, %v46
    %v49 = vmul.f32 %v33, %v47
    %v50 = vlaneseq
    %v51 = vshrl.u32 %v50, 7
    %v52 = vsub.s32 0, %v51
    %v53 = vrot.slane %v20, %v52
    %v54 = vmul.f32 %v48, %v53
    %v55 = vmul.f32 %v49, %v53
    %v56 = vlaneseq
    %v57 = vshrl.u32 %v56, 7
    %v58 = vsub.s32 0, %v57
    %v59 = vrot.slane %v21, %v58
    %v60 = vadd.f32 %v54, %v59
    %v61 = vadd.f32 %v55, %v59
    %v62 = vld [vmem:[%s2 + $0x10] sm:$0xff]
    %v63 = vld [vmem:[%s2 + $0x18] sm:$0xff]
    %v64 = vld [vmem:[%s2 + $0x20] sm:$0xff]
    %v65 = vld [vmem:[%s2 + $0x28] sm:$0xff]
    %v66 = vld [vmem:[%s2 + $0x30] sm:$0x1]
    %v67 = vld [vmem:[%s2 + $0x38] sm:$0xff]
    %v68 = vld [vmem:[%s2 + $0x40] sm:$0xff]
    %v69 = vld [vmem:[%s2 + $0x48] sm:$0xff]
    %v70 = vld [vmem:[%s2 + $0x50] sm:$0xff]
    %v71 = vld [vmem:[%s2 + $0x58] sm:$0x1]
    %v72 = vlaneseq
    %v73 = vshrl.u32 %v72, 7
    %v74 = vsub.s32 0, %v73
    %v75 = vrot.slane %v66, %v74
    %v77 = vsel %vm22, %v60, 0
    %v80 = vsel %vm22, %v61, 0
    %82 = vmatprep.subr.mxu0 0.0
    %83 = vmatpush1.msra.mxu0 %v62
    %84 = vmatprep.subr.mxu0 0.0
    %85 = vmatpush1.msra.mxu0 %v63
    %86 = vmatprep.subr.mxu0 0.0
    %87 = vmatpush1.msra.mxu0 %v64
    %88 = vmatprep.subr.mxu0 0.0
    %89 = vmatpush1.msra.mxu0 %v65
    %90 = vmatprep.subr.mxu0 0.0
    %91 = vmatpush1.msra.mxu0 0.0
    %92 = vmatprep.subr.mxu0 0.0
    %93 = vmatpush1.msra.mxu0 0.0
    %94 = vmatprep.subr.mxu0 0.0
    %95 = vmatpush1.msra.mxu0 0.0
    %96 = vmatprep.subr.mxu0 0.0
    %97 = vmatpush1.msra.mxu0 0.0
    %98 = vmatprep.subr.mxu0 0.0
    %99 = vmatpush1.msra.mxu0 0.0
    %100 = vmatprep.subr.mxu0 0.0
    %101 = vmatpush1.msra.mxu0 0.0
    %102 = vmatprep.subr.mxu0 0.0
    %103 = vmatpush1.msra.mxu0 0.0
    %104 = vmatprep.subr.mxu0 0.0
    %105 = vmatpush1.msra.mxu0 0.0
    %106 = vmatprep.subr.mxu0 0.0
    %107 = vmatpush1.msra.mxu0 0.0
    %108 = vmatprep.subr.mxu0 0.0
    %109 = vmatpush1.msra.mxu0 0.0
    %110 = vmatprep.subr.mxu0 0.0
    %111 = vmatpush1.msra.mxu0 0.0
    %112 = vmatprep.subr.mxu0 0.0
    %113 = vmatpush1.msra.mxu0 0.0
    %114 = vmatprep.subr.mxu0 0.0
    %115 = vmatpush1.msra.mxu0 0.0
    %116 = vmatprep.subr.mxu0 0.0
    %117 = vmatpush1.msra.mxu0 0.0
    %118 = vmatprep.subr.mxu0 0.0
    %119 = vmatpush1.msra.mxu0 0.0
    %120 = vmatprep.subr.mxu0 0.0
    %121 = vmatpush1.msra.mxu0 0.0
    %122 = vmatprep.subr.mxu0 0.0
    %123 = vmatpush1.msra.mxu0 0.0
    %124 = vmatprep.subr.mxu0 0.0
    %125 = vmatpush1.msra.mxu0 0.0
    %126 = vmatprep.subr.mxu0 0.0
    %127 = vmatpush1.msra.mxu0 0.0
    %128 = vmatprep.subr.mxu0 0.0
    %129 = vmatpush1.msra.mxu0 0.0
    %130 = vmatprep.subr.mxu0 0.0
    %131 = vmatpush1.msra.mxu0 0.0
    %132 = vmatprep.subr.mxu0 0.0
    %133 = vmatpush1.msra.mxu0 0.0
    %134 = vmatprep.subr.mxu0 0.0
    %135 = vmatpush1.msra.mxu0 0.0
    %136 = vmatprep.subr.mxu0 0.0
    %137 = vmatpush1.msra.mxu0 0.0
    %138 = vmatprep.subr.mxu0 0.0
    %139 = vmatpush1.msra.mxu0 0.0
    %140 = vmatprep.subr.mxu0 0.0
    %141 = vmatpush1.msra.mxu0 0.0
    %142 = vmatprep.subr.mxu0 0.0
    %143 = vmatpush1.msra.mxu0 0.0
    %144 = vmatprep.subr.mxu0 0.0
    %145 = vmatpush1.msra.mxu0 0.0
    %146 = vmatprep.mubr.f32.mxu0 0.0
    %147 = vmatmul.mubr.f32.gmra.mrb[0].mxu0 %v77
    %v148 = vpop.f32.mrb[0].mxu0
    %v149 = vadd.f32 %v75, %v148
    %v150 = vpop.f32.mrb[0].mxu0
    %151 = vmatprep.mubr.f32.mxu0 0.0
    %152 = vmatmul.mubr.f32.gmra.mrb[0].mxu0 %v80
    %v153 = vpop.f32.mrb[0].mxu0
    %v154 = vadd.f32 %v75, %v153
    %v155 = vpop.f32.mrb[0].mxu0
    %156 = vdwg.mxu0
    %v157 = vsub.f32 0.0, %v149
    %v158 = vsub.f32 0.0, %v154
    %v159 = vmul.f32 %v157, 1.442695
    %v160 = vpow.pop %v159
    %v161 = vmul.f32 %v158, 1.442695
    %v162 = vpow.pop %v161
    %v163 = vadd.f32 %v160, 1.0
    %v164 = vadd.f32 %v162, 1.0
    %v165 = vrcp.pop %v163
    %v166 = vrcp.pop %v164
    %v167 = vmul.f32 %v149, %v165
    %v168 = vmul.f32 %v154, %v166
    %v169 = vlaneseq
    %v170 = vshrl.u32 %v169, 7
    %v171 = vsub.s32 0, %v170
    %v172 = vrot.slane %v71, %v171
    %v174 = vsel %vm22, %v167, 0
    %v177 = vsel %vm22, %v168, 0
    %179 = vmatprep.subr.mxu0 0.0
    %180 = vmatpush1.msra.mxu0 %v67
    %181 = vmatprep.subr.mxu0 0.0
    %182 = vmatpush1.msra.mxu0 %v68
    %183 = vmatprep.subr.mxu0 0.0
    %184 = vmatpush1.msra.mxu0 %v69
    %185 = vmatprep.subr.mxu0 0.0
    %186 = vmatpush1.msra.mxu0 %v70
    %187 = vmatprep.subr.mxu0 0.0
    %188 = vmatpush1.msra.mxu0 0.0
    %189 = vmatprep.subr.mxu0 0.0
    %190 = vmatpush1.msra.mxu0 0.0
    %191 = vmatprep.subr.mxu0 0.0
    %192 = vmatpush1.msra.mxu0 0.0
    %193 = vmatprep.subr.mxu0 0.0
    %194 = vmatpush1.msra.mxu0 0.0
    %195 = vmatprep.subr.mxu0 0.0
    %196 = vmatpush1.msra.mxu0 0.0
    %197 = vmatprep.subr.mxu0 0.0
    %198 = vmatpush1.msra.mxu0 0.0
    %199 = vmatprep.subr.mxu0 0.0
    %200 = vmatpush1.msra.mxu0 0.0
    %201 = vmatprep.subr.mxu0 0.0
    %202 = vmatpush1.msra.mxu0 0.0
    %203 = vmatprep.subr.mxu0 0.0
    %204 = vmatpush1.msra.mxu0 0.0
    %205 = vmatprep.subr.mxu0 0.0
    %206 = vmatpush1.msra.mxu0 0.0
    %207 = vmatprep.subr.mxu0 0.0
    %208 = vmatpush1.msra.mxu0 0.0
    %209 = vmatprep.subr.mxu0 0.0
    %210 = vmatpush1.msra.mxu0 0.0
    %211 = vmatprep.subr.mxu0 0.0
    %212 = vmatpush1.msra.mxu0 0.0
    %213 = vmatprep.subr.mxu0 0.0
    %214 = vmatpush1.msra.mxu0 0.0
    %215 = vmatprep.subr.mxu0 0.0
    %216 = vmatpush1.msra.mxu0 0.0
    %217 = vmatprep.subr.mxu0 0.0
    %218 = vmatpush1.msra.mxu0 0.0
    %219 = vmatprep.subr.mxu0 0.0
    %220 = vmatpush1.msra.mxu0 0.0
    %221 = vmatprep.subr.mxu0 0.0
    %222 = vmatpush1.msra.mxu0 0.0
    %223 = vmatprep.subr.mxu0 0.0
    %224 = vmatpush1.msra.mxu0 0.0
    %225 = vmatprep.subr.mxu0 0.0
    %226 = vmatpush1.msra.mxu0 0.0
    %227 = vmatprep.subr.mxu0 0.0
    %228 = vmatpush1.msra.mxu0 0.0
    %229 = vmatprep.subr.mxu0 0.0
    %230 = vmatpush1.msra.mxu0 0.0
    %231 = vmatprep.subr.mxu0 0.0
    %232 = vmatpush1.msra.mxu0 0.0
    %233 = vmatprep.subr.mxu0 0.0
    %234 = vmatpush1.msra.mxu0 0.0
    %235 = vmatprep.subr.mxu0 0.0
    %236 = vmatpush1.msra.mxu0 0.0
    %237 = vmatprep.subr.mxu0 0.0
    %238 = vmatpush1.msra.mxu0 0.0
    %239 = vmatprep.subr.mxu0 0.0
    %240 = vmatpush1.msra.mxu0 0.0
    %241 = vmatprep.subr.mxu0 0.0
    %242 = vmatpush1.msra.mxu0 0.0
    %243 = vmatprep.mubr.f32.mxu0 0.0
    %244 = vmatmul.mubr.f32.gmra.mrb[0].mxu0 %v174
    %v245 = vpop.f32.mrb[0].mxu0
    %v246 = vadd.f32 %v172, %v245
    %v247 = vpop.f32.mrb[0].mxu0
    %248 = vmatprep.mubr.f32.mxu0 0.0
    %249 = vmatmul.mubr.f32.gmra.mrb[0].mxu0 %v177
    %v250 = vpop.f32.mrb[0].mxu0
    %v251 = vadd.f32 %v172, %v250
    %v252 = vpop.f32.mrb[0].mxu0
    %253 = vdwg.mxu0
    %254 = vxpose.xlu0.b32.start [1/16] %v246, 128
    %255 = vxpose.xlu0.b32.cont [2/16] %v251, 128
    %256 = vxpose.xlu0.b32.cont [3/16] 0.0, 128
    %257 = vxpose.xlu0.b32.cont [4/16] 0.0, 128
    %258 = vxpose.xlu0.b32.cont [5/16] 0.0, 128
    %259 = vxpose.xlu0.b32.cont [6/16] 0.0, 128
    %260 = vxpose.xlu0.b32.cont [7/16] 0.0, 128
    %261 = vxpose.xlu0.b32.cont [8/16] 0.0, 128
    %262 = vxpose.xlu0.b32.cont [9/16] 0.0, 128
    %263 = vxpose.xlu0.b32.cont [10/16] 0.0, 128
    %264 = vxpose.xlu0.b32.cont [11/16] 0.0, 128
    %265 = vxpose.xlu0.b32.cont [12/16] 0.0, 128
    %266 = vxpose.xlu0.b32.cont [13/16] 0.0, 128
    %267 = vxpose.xlu0.b32.cont [14/16] 0.0, 128
    %268 = vxpose.xlu0.b32.cont [15/16] 0.0, 128
    %269 = vxpose.xlu0.b32.end [16/16] 0.0, 128
    %v270 = vpop.trf.xlu0
    %v271 = vpop.trf.xlu0
    %v272 = vpop.trf.xlu0
    %v273 = vpop.trf.xlu0
    %v274 = vpop.trf.xlu0
    %v275 = vpop.trf.xlu0
    %v276 = vpop.trf.xlu0
    %v277 = vpop.trf.xlu0
    %v278 = vpop.trf.xlu0
    %v279 = vpop.trf.xlu0
    %v280 = vpop.trf.xlu0
    %v281 = vpop.trf.xlu0
    %v282 = vpop.trf.xlu0
    %v283 = vpop.trf.xlu0
    %v284 = vpop.trf.xlu0
    %v285 = vpop.trf.xlu0
    %v286 = vld [vmem:[%s2 + $0x60] sm:$0xff]
    %v287 = vld [vmem:[%s2 + $0x68] sm:$0xff]
    %v288 = vld [vmem:[%s2 + $0x70] sm:$0x1]
    %v289 = vlaneseq
    %v290 = vshrl.u32 %v289, 7
    %v291 = vsub.s32 0, %v290
    %v292 = vrot.slane %v288, %v291
    %vm293 = vcmask 130048
    %v295 = vsel %vm293, %v270, 0
    %v298 = vsel %vm293, %v271, 0
    %v301 = vsel %vm293, %v272, 0
    %v304 = vsel %vm293, %v273, 0
    %306 = vmatprep.subr.mxu0 0.0
    %307 = vmatpush1.msra.mxu0 %v286
    %308 = vmatprep.subr.mxu0 0.0
    %309 = vmatpush1.msra.mxu0 %v287
    %310 = vmatprep.subr.mxu0 0.0
    %311 = vmatpush1.msra.mxu0 0.0
    %312 = vmatprep.subr.mxu0 0.0
    %313 = vmatpush1.msra.mxu0 0.0
    %314 = vmatprep.subr.mxu0 0.0
    %315 = vmatpush1.msra.mxu0 0.0
    %316 = vmatprep.subr.mxu0 0.0
    %317 = vmatpush1.msra.mxu0 0.0
    %318 = vmatprep.subr.mxu0 0.0
    %319 = vmatpush1.msra.mxu0 0.0
    %320 = vmatprep.subr.mxu0 0.0
    %321 = vmatpush1.msra.mxu0 0.0
    %322 = vmatprep.subr.mxu0 0.0
    %323 = vmatpush1.msra.mxu0 0.0
    %324 = vmatprep.subr.mxu0 0.0
    %325 = vmatpush1.msra.mxu0 0.0
    %326 = vmatprep.subr.mxu0 0.0
    %327 = vmatpush1.msra.mxu0 0.0
    %328 = vmatprep.subr.mxu0 0.0
    %329 = vmatpush1.msra.mxu0 0.0
    %330 = vmatprep.subr.mxu0 0.0
    %331 = vmatpush1.msra.mxu0 0.0
    %332 = vmatprep.subr.mxu0 0.0
    %333 = vmatpush1.msra.mxu0 0.0
    %334 = vmatprep.subr.mxu0 0.0
    %335 = vmatpush1.msra.mxu0 0.0
    %336 = vmatprep.subr.mxu0 0.0
    %337 = vmatpush1.msra.mxu0 0.0
    %338 = vmatprep.subr.mxu0 0.0
    %339 = vmatpush1.msra.mxu0 0.0
    %340 = vmatprep.subr.mxu0 0.0
    %341 = vmatpush1.msra.mxu0 0.0
    %342 = vmatprep.subr.mxu0 0.0
    %343 = vmatpush1.msra.mxu0 0.0
    %344 = vmatprep.subr.mxu0 0.0
    %345 = vmatpush1.msra.mxu0 0.0
    %346 = vmatprep.subr.mxu0 0.0
    %347 = vmatpush1.msra.mxu0 0.0
    %348 = vmatprep.subr.mxu0 0.0
    %349 = vmatpush1.msra.mxu0 0.0
    %350 = vmatprep.subr.mxu0 0.0
    %351 = vmatpush1.msra.mxu0 0.0
    %352 = vmatprep.subr.mxu0 0.0
    %353 = vmatpush1.msra.mxu0 0.0
    %354 = vmatprep.subr.mxu0 0.0
    %355 = vmatpush1.msra.mxu0 0.0
    %356 = vmatprep.subr.mxu0 0.0
    %357 = vmatpush1.msra.mxu0 0.0
    %358 = vmatprep.subr.mxu0 0.0
    %359 = vmatpush1.msra.mxu0 0.0
    %360 = vmatprep.subr.mxu0 0.0
    %361 = vmatpush1.msra.mxu0 0.0
    %362 = vmatprep.subr.mxu0 0.0
    %363 = vmatpush1.msra.mxu0 0.0
    %364 = vmatprep.subr.mxu0 0.0
    %365 = vmatpush1.msra.mxu0 0.0
    %366 = vmatprep.subr.mxu0 0.0
    %367 = vmatpush1.msra.mxu0 0.0
    %368 = vmatprep.subr.mxu0 0.0
    %369 = vmatpush1.msra.mxu0 0.0
    %370 = vmatprep.mubr.f32.mxu0 0.0
    %371 = vmatmul.mubr.f32.gmra.mrb[0].mxu0 %v295
    %v372 = vpop.f32.mrb[0].mxu0
    %v373 = vadd.f32 %v292, %v372
    %v374 = vpop.f32.mrb[0].mxu0
    %375 = vmatprep.mubr.f32.mxu0 0.0
    %376 = vmatmul.mubr.f32.gmra.mrb[0].mxu0 %v298
    %v377 = vpop.f32.mrb[0].mxu0
    %v378 = vadd.f32 %v292, %v377
    %v379 = vpop.f32.mrb[0].mxu0
    %380 = vmatprep.mubr.f32.mxu0 0.0
    %381 = vmatmul.mubr.f32.gmra.mrb[0].mxu0 %v301
    %v382 = vpop.f32.mrb[0].mxu0
    %v383 = vadd.f32 %v292, %v382
    %v384 = vpop.f32.mrb[0].mxu0
    %385 = vmatprep.mubr.f32.mxu0 0.0
    %386 = vmatmul.mubr.f32.gmra.mrb[0].mxu0 %v304
    %v387 = vpop.f32.mrb[0].mxu0
    %v388 = vadd.f32 %v292, %v387
    %v389 = vpop.f32.mrb[0].mxu0
    %390 = vdwg.mxu0
    %v391 = vsub.f32 0.0, %v373
    %v392 = vsub.f32 0.0, %v378
    %v393 = vsub.f32 0.0, %v383
    %v394 = vsub.f32 0.0, %v388
    %v395 = vmul.f32 %v391, 1.442695
    %v396 = vpow.pop %v395
    %v397 = vmul.f32 %v392, 1.442695
    %v398 = vpow.pop %v397
    %v399 = vmul.f32 %v393, 1.442695
    %v400 = vpow.pop %v399
    %v401 = vmul.f32 %v394, 1.442695
    %v402 = vpow.pop %v401
    %v403 = vadd.f32 %v396, 1.0
    %v404 = vadd.f32 %v398, 1.0
    %v405 = vadd.f32 %v400, 1.0
    %v406 = vadd.f32 %v402, 1.0
    %v407 = vrcp.pop %v403
    %v408 = vrcp.pop %v404
    %v409 = vrcp.pop %v405
    %v410 = vrcp.pop %v406
    %v411 = vmul.f32 %v373, %v407
    %v412 = vmul.f32 %v378, %v408
    %v413 = vmul.f32 %v383, %v409
    %v414 = vmul.f32 %v388, %v410
    %v415 = vld [vmem:[%s2 + $0x78] sm:$0xff]
    %v416 = vld [vmem:[%s2 + $0x80] sm:$0xff]
    %v417 = vld [vmem:[%s2 + $0x88] sm:$0xff]
    %v418 = vld [vmem:[%s2 + $0x90] sm:$0xff]
    %v419 = vld [vmem:[%s2 + $0x98] sm:$0x1]
    %v420 = vlaneseq
    %v421 = vshrl.u32 %v420, 7
    %v422 = vsub.s32 0, %v421
    %v423 = vrot.slane %v419, %v422
    %v425 = vsel %vm22, %v411, 0
    %v428 = vsel %vm22, %v412, 0
    %v431 = vsel %vm22, %v413, 0
    %v434 = vsel %vm22, %v414, 0
    %436 = vmatprep.subr.mxu0 0.0
    %437 = vmatpush1.msra.mxu0 %v415
    %438 = vmatprep.subr.mxu0 0.0
    %439 = vmatpush1.msra.mxu0 %v416
    %440 = vmatprep.subr.mxu0 0.0
    %441 = vmatpush1.msra.mxu0 %v417
    %442 = vmatprep.subr.mxu0 0.0
    %443 = vmatpush1.msra.mxu0 %v418
    %444 = vmatprep.subr.mxu0 0.0
    %445 = vmatpush1.msra.mxu0 0.0
    %446 = vmatprep.subr.mxu0 0.0
    %447 = vmatpush1.msra.mxu0 0.0
    %448 = vmatprep.subr.mxu0 0.0
    %449 = vmatpush1.msra.mxu0 0.0
    %450 = vmatprep.subr.mxu0 0.0
    %451 = vmatpush1.msra.mxu0 0.0
    %452 = vmatprep.subr.mxu0 0.0
    %453 = vmatpush1.msra.mxu0 0.0
    %454 = vmatprep.subr.mxu0 0.0
    %455 = vmatpush1.msra.mxu0 0.0
    %456 = vmatprep.subr.mxu0 0.0
    %457 = vmatpush1.msra.mxu0 0.0
    %458 = vmatprep.subr.mxu0 0.0
    %459 = vmatpush1.msra.mxu0 0.0
    %460 = vmatprep.subr.mxu0 0.0
    %461 = vmatpush1.msra.mxu0 0.0
    %462 = vmatprep.subr.mxu0 0.0
    %463 = vmatpush1.msra.mxu0 0.0
    %464 = vmatprep.subr.mxu0 0.0
    %465 = vmatpush1.msra.mxu0 0.0
    %466 = vmatprep.subr.mxu0 0.0
    %467 = vmatpush1.msra.mxu0 0.0
    %468 = vmatprep.subr.mxu0 0.0
    %469 = vmatpush1.msra.mxu0 0.0
    %470 = vmatprep.subr.mxu0 0.0
    %471 = vmatpush1.msra.mxu0 0.0
    %472 = vmatprep.subr.mxu0 0.0
    %473 = vmatpush1.msra.mxu0 0.0
    %474 = vmatprep.subr.mxu0 0.0
    %475 = vmatpush1.msra.mxu0 0.0
    %476 = vmatprep.subr.mxu0 0.0
    %477 = vmatpush1.msra.mxu0 0.0
    %478 = vmatprep.subr.mxu0 0.0
    %479 = vmatpush1.msra.mxu0 0.0
    %480 = vmatprep.subr.mxu0 0.0
    %481 = vmatpush1.msra.mxu0 0.0
    %482 = vmatprep.subr.mxu0 0.0
    %483 = vmatpush1.msra.mxu0 0.0
    %484 = vmatprep.subr.mxu0 0.0
    %485 = vmatpush1.msra.mxu0 0.0
    %486 = vmatprep.subr.mxu0 0.0
    %487 = vmatpush1.msra.mxu0 0.0
    %488 = vmatprep.subr.mxu0 0.0
    %489 = vmatpush1.msra.mxu0 0.0
    %490 = vmatprep.subr.mxu0 0.0
    %491 = vmatpush1.msra.mxu0 0.0
    %492 = vmatprep.subr.mxu0 0.0
    %493 = vmatpush1.msra.mxu0 0.0
    %494 = vmatprep.subr.mxu0 0.0
    %495 = vmatpush1.msra.mxu0 0.0
    %496 = vmatprep.subr.mxu0 0.0
    %497 = vmatpush1.msra.mxu0 0.0
    %498 = vmatprep.subr.mxu0 0.0
    %499 = vmatpush1.msra.mxu0 0.0
    %500 = vmatprep.mubr.f32.mxu0 0.0
    %501 = vmatmul.mubr.f32.gmra.mrb[0].mxu0 %v425
    %v502 = vpop.f32.mrb[0].mxu0
    %v503 = vadd.f32 %v423, %v502
    %v504 = vpop.f32.mrb[0].mxu0
    %505 = vmatprep.mubr.f32.mxu0 0.0
    %506 = vmatmul.mubr.f32.gmra.mrb[0].mxu0 %v428
    %v507 = vpop.f32.mrb[0].mxu0
    %v508 = vadd.f32 %v423, %v507
    %v509 = vpop.f32.mrb[0].mxu0
    %510 = vmatprep.mubr.f32.mxu0 0.0
    %511 = vmatmul.mubr.f32.gmra.mrb[0].mxu0 %v431
    %v512 = vpop.f32.mrb[0].mxu0
    %v513 = vadd.f32 %v423, %v512
    %v514 = vpop.f32.mrb[0].mxu0
    %515 = vmatprep.mubr.f32.mxu0 0.0
    %516 = vmatmul.mubr.f32.gmra.mrb[0].mxu0 %v434
    %v517 = vpop.f32.mrb[0].mxu0
    %v518 = vadd.f32 %v423, %v517
    %v519 = vpop.f32.mrb[0].mxu0
    %520 = vdwg.mxu0
    %521 = vxpose.xlu0.b32.start [1/16] %v503, 128
    %522 = vxpose.xlu0.b32.cont [2/16] %v508, 128
    %523 = vxpose.xlu0.b32.cont [3/16] %v513, 128
    %524 = vxpose.xlu0.b32.cont [4/16] %v518, 128
    %525 = vxpose.xlu0.b32.cont [5/16] 0.0, 128
    %526 = vxpose.xlu0.b32.cont [6/16] 0.0, 128
    %527 = vxpose.xlu0.b32.cont [7/16] 0.0, 128
    %528 = vxpose.xlu0.b32.cont [8/16] 0.0, 128
    %529 = vxpose.xlu0.b32.cont [9/16] 0.0, 128
    %530 = vxpose.xlu0.b32.cont [10/16] 0.0, 128
    %531 = vxpose.xlu0.b32.cont [11/16] 0.0, 128
    %532 = vxpose.xlu0.b32.cont [12/16] 0.0, 128
    %533 = vxpose.xlu0.b32.cont [13/16] 0.0, 128
    %534 = vxpose.xlu0.b32.cont [14/16] 0.0, 128
    %535 = vxpose.xlu0.b32.cont [15/16] 0.0, 128
    %536 = vxpose.xlu0.b32.end [16/16] 0.0, 128
    %v537 = vpop.trf.xlu0
    %v538 = vpop.trf.xlu0
    %v539 = vpop.trf.xlu0
    %v540 = vpop.trf.xlu0
    %v541 = vpop.trf.xlu0
    %v542 = vpop.trf.xlu0
    %v543 = vpop.trf.xlu0
    %v544 = vpop.trf.xlu0
    %v545 = vpop.trf.xlu0
    %v546 = vpop.trf.xlu0
    %v547 = vpop.trf.xlu0
    %v548 = vpop.trf.xlu0
    %v549 = vpop.trf.xlu0
    %v550 = vpop.trf.xlu0
    %v551 = vpop.trf.xlu0
    %v552 = vpop.trf.xlu0
    %v553 = vadd.f32 %v18, %v537
    %v554 = vadd.f32 %v19, %v538
    %555 = vst.msk [vmem:[#allocation4] sm:$0xff] %vm22, %v553
    %556 = vst.msk [vmem:[#allocation4 + $0x8] sm:$0xff] %vm22, %v554
    %v557 = vld [vmem:[%s2 + $0xa0] sm:$0x1]
    %v558 = vld [vmem:[%s2 + $0xa8] sm:$0x1]
    %v559 = vsel %vm22, %v553, 0.0
    %560 = vadd.xlane.f32.xlu0 %v559
    %v561 = vpop.xlane.xlu0 %560
    %v562 = vsel %vm22, %v554, 0.0
    %563 = vadd.xlane.f32.xlu0 %v562
    %v564 = vpop.xlane.xlu0 %563
    %v565 = vmul.f32 %v561, %v29
    %v566 = vmul.f32 %v564, %v29
    %v567 = vsub.f32 %v553, %v565
    %v568 = vsub.f32 %v554, %v566
    %v569 = vmul.f32 %v567, %v567
    %v570 = vmul.f32 %v568, %v568
    %v571 = vsel %vm22, %v569, 0.0
    %572 = vadd.xlane.f32.xlu0 %v571
    %v573 = vpop.xlane.xlu0 %572
    %v574 = vsel %vm22, %v570, 0.0
    %575 = vadd.xlane.f32.xlu0 %v574
    %v576 = vpop.xlane.xlu0 %575
    %v577 = vmul.f32 %v573, %v29
    %v578 = vmul.f32 %v576, %v29
    %v579 = vadd.f32 %v577, 1e-05
    %v580 = vadd.f32 %v578, 1e-05
    %v581 = vrsqrt.pop %v579
    %v582 = vrsqrt.pop %v580
    %v583 = vmul.f32 %v567, %v581
    %v584 = vmul.f32 %v568, %v582
    %v585 = vlaneseq
    %v586 = vshrl.u32 %v585, 7
    %v587 = vsub.s32 0, %v586
    %v588 = vrot.slane %v557, %v587
    %v589 = vmul.f32 %v583, %v588
    %v590 = vmul.f32 %v584, %v588
    %v591 = vlaneseq
    %v592 = vshrl.u32 %v591, 7
    %v593 = vsub.s32 0, %v592
    %v594 = vrot.slane %v558, %v593
    %v595 = vadd.f32 %v589, %v594
    %v596 = vadd.f32 %v590, %v594
    %v597 = vld [vmem:[%s2 + $0xb0] sm:$0xff]
    %v598 = vld [vmem:[%s2 + $0xb8] sm:$0xff]
    %v599 = vld [vmem:[%s2 + $0xc0] sm:$0xff]
    %v600 = vld [vmem:[%s2 + $0xc8] sm:$0xff]
    %v602 = vsel %vm22, %v595, 0
    %v605 = vsel %vm22, %v596, 0
    %607 = vmatprep.subr.mxu0 0.0
    %608 = vmatpush1.msra.mxu0 %v597
    %609 = vmatprep.subr.mxu0 0.0
    %610 = vmatpush1.msra.mxu0 %v598
    %611 = vmatprep.subr.mxu0 0.0
    %612 = vmatpush1.msra.mxu0 %v599
    %613 = vmatprep.subr.mxu0 0.0
    %614 = vmatpush1.msra.mxu0 %v600
    %615 = vmatprep.subr.mxu0 0.0
    %616 = vmatpush1.msra.mxu0 0.0
    %617 = vmatprep.subr.mxu0 0.0
    %618 = vmatpush1.msra.mxu0 0.0
    %619 = vmatprep.subr.mxu0 0.0
    %620 = vmatpush1.msra.mxu0 0.0
    %621 = vmatprep.subr.mxu0 0.0
    %622 = vmatpush1.msra.mxu0 0.0
    %623 = vmatprep.subr.mxu0 0.0
    %624 = vmatpush1.msra.mxu0 0.0
    %625 = vmatprep.subr.mxu0 0.0
    %626 = vmatpush1.msra.mxu0 0.0
    %627 = vmatprep.subr.mxu0 0.0
    %628 = vmatpush1.msra.mxu0 0.0
    %629 = vmatprep.subr.mxu0 0.0
    %630 = vmatpush1.msra.mxu0 0.0
    %631 = vmatprep.subr.mxu0 0.0
    %632 = vmatpush1.msra.mxu0 0.0
    %633 = vmatprep.subr.mxu0 0.0
    %634 = vmatpush1.msra.mxu0 0.0
    %635 = vmatprep.subr.mxu0 0.0
    %636 = vmatpush1.msra.mxu0 0.0
    %637 = vmatprep.subr.mxu0 0.0
    %638 = vmatpush1.msra.mxu0 0.0
    %639 = vmatprep.subr.mxu0 0.0
    %640 = vmatpush1.msra.mxu0 0.0
    %641 = vmatprep.subr.mxu0 0.0
    %642 = vmatpush1.msra.mxu0 0.0
    %643 = vmatprep.subr.mxu0 0.0
    %644 = vmatpush1.msra.mxu0 0.0
    %645 = vmatprep.subr.mxu0 0.0
    %646 = vmatpush1.msra.mxu0 0.0
    %647 = vmatprep.subr.mxu0 0.0
    %648 = vmatpush1.msra.mxu0 0.0
    %649 = vmatprep.subr.mxu0 0.0
    %650 = vmatpush1.msra.mxu0 0.0
    %651 = vmatprep.subr.mxu0 0.0
    %652 = vmatpush1.msra.mxu0 0.0
    %653 = vmatprep.subr.mxu0 0.0
    %654 = vmatpush1.msra.mxu0 0.0
    %655 = vmatprep.subr.mxu0 0.0
    %656 = vmatpush1.msra.mxu0 0.0
    %657 = vmatprep.subr.mxu0 0.0
    %658 = vmatpush1.msra.mxu0 0.0
    %659 = vmatprep.subr.mxu0 0.0
    %660 = vmatpush1.msra.mxu0 0.0
    %661 = vmatprep.subr.mxu0 0.0
    %662 = vmatpush1.msra.mxu0 0.0
    %663 = vmatprep.subr.mxu0 0.0
    %664 = vmatpush1.msra.mxu0 0.0
    %665 = vmatprep.subr.mxu0 0.0
    %666 = vmatpush1.msra.mxu0 0.0
    %667 = vmatprep.subr.mxu0 0.0
    %668 = vmatpush1.msra.mxu0 0.0
    %669 = vmatprep.subr.mxu0 0.0
    %670 = vmatpush1.msra.mxu0 0.0
    %671 = vmatprep.mubr.f32.mxu0 0.0
    %672 = vmatmul.mubr.f32.gmra.mrb[0].mxu0 %v602
    %v673 = vpop.f32.mrb[0].mxu0
    %v674 = vadd.f32 0.0, %v673
    %v675 = vpop.f32.mrb[0].mxu0
    %676 = vmatprep.mubr.f32.mxu0 0.0
    %677 = vmatmul.mubr.f32.gmra.mrb[0].mxu0 %v605
    %v678 = vpop.f32.mrb[0].mxu0
    %v679 = vadd.f32 0.0, %v678
    %v680 = vpop.f32.mrb[0].mxu0
    %681 = vdwg.mxu0
    %v682 = vld [vmem:[%s2 + $0xd0] sm:$0x1]
    %v683 = vld [vmem:[%s2 + $0xd8] sm:$0x1]
    %v684 = vsel %vm22, %v674, 0.0
    %685 = vadd.xlane.f32.xlu0 %v684
    %v686 = vpop.xlane.xlu0 %685
    %v687 = vsel %vm22, %v679, 0.0
    %688 = vadd.xlane.f32.xlu0 %v687
    %v689 = vpop.xlane.xlu0 %688
    %v690 = vmul.f32 %v686, %v29
    %v691 = vmul.f32 %v689, %v29
    %v692 = vsub.f32 %v674, %v690
    %v693 = vsub.f32 %v679, %v691
    %v694 = vmul.f32 %v692, %v692
    %v695 = vmul.f32 %v693, %v693
    %v696 = vsel %vm22, %v694, 0.0
    %697 = vadd.xlane.f32.xlu0 %v696
    %v698 = vpop.xlane.xlu0 %697
    %v699 = vsel %vm22, %v695, 0.0
    %700 = vadd.xlane.f32.xlu0 %v699
    %v701 = vpop.xlane.xlu0 %700
    %v702 = vmul.f32 %v698, %v29
    %v703 = vmul.f32 %v701, %v29
    %v704 = vadd.f32 %v702, 1e-05
    %v705 = vadd.f32 %v703, 1e-05
    %v706 = vrsqrt.pop %v704
    %v707 = vrsqrt.pop %v705
    %v708 = vmul.f32 %v692, %v706
    %v709 = vmul.f32 %v693, %v707
    %v710 = vlaneseq
    %v711 = vshrl.u32 %v710, 7
    %v712 = vsub.s32 0, %v711
    %v713 = vrot.slane %v682, %v712
    %v714 = vmul.f32 %v708, %v713
    %v715 = vmul.f32 %v709, %v713
    %v716 = vlaneseq
    %v717 = vshrl.u32 %v716, 7
    %v718 = vsub.s32 0, %v717
    %v719 = vrot.slane %v683, %v718
    %v720 = vadd.f32 %v714, %v719
    %v721 = vadd.f32 %v715, %v719
    %v722 = vld [vmem:[%s0] sm:$0x1]
    %vm723 = vcmask 253952
    %724 = vst.msk [vmem:[#allocation2] sm:$0x1] %vm723, %v722
    %v725 = vld [vmem:[%s0 + $0x1] sm:$0xff]
    %v726 = vadd.f32 %v725, %v720
    %727 = vst.msk [vmem:[#allocation2 + $0x1] sm:$0xff] %vm22, %v726
    %v728 = vld [vmem:[%s0 + $0x9] sm:$0x1]
    %729 = vst.msk [vmem:[#allocation2 + $0x9] sm:$0x1] %vm723, %v728
    %v730 = vld [vmem:[%s0 + $0xa] sm:$0xff]
    %v731 = vadd.f32 %v730, %v721
    %732 = vst.msk [vmem:[#allocation2 + $0xa] sm:$0xff] %vm22, %v731
    %v733 = vld [vmem:[#allocation2] sm:$0xff]
    %v734 = vld [vmem:[#allocation2 + $0x8] sm:$0xff]
    %v735 = vld [vmem:[#allocation2 + $0x10] sm:$0x3]
    %v736 = vld [vmem:[%s2 + $0xe0] sm:$0x1]
    %v737 = vld [vmem:[%s2 + $0xe8] sm:$0x1]
    %v738 = vsel %vm22, %v733, 0.0
    %739 = vadd.xlane.f32.xlu0 %v738
    %v740 = vpop.xlane.xlu0 %739
    %v741 = vsel %vm22, %v734, 0.0
    %742 = vadd.xlane.f32.xlu0 %v741
    %v743 = vpop.xlane.xlu0 %742
    %vm744 = vcmask 254976
    %v745 = vsel %vm744, %v735, 0.0
    %746 = vadd.xlane.f32.xlu0 %v745
    %v747 = vpop.xlane.xlu0 %746
    %v748 = vmul.f32 %v740, %v29
    %v749 = vmul.f32 %v743, %v29
    %v750 = vmul.f32 %v747, %v29
    %v751 = vsub.f32 %v733, %v748
    %v752 = vsub.f32 %v734, %v749
    %v753 = vsub.f32 %v735, %v750
    %v754 = vmul.f32 %v751, %v751
    %v755 = vmul.f32 %v752, %v752
    %v756 = vmul.f32 %v753, %v753
    %v757 = vsel %vm22, %v754, 0.0
    %758 = vadd.xlane.f32.xlu0 %v757
    %v759 = vpop.xlane.xlu0 %758
    %v760 = vsel %vm22, %v755, 0.0
    %761 = vadd.xlane.f32.xlu0 %v760
    %v762 = vpop.xlane.xlu0 %761
    %v763 = vsel %vm744, %v756, 0.0
    %764 = vadd.xlane.f32.xlu0 %v763
    %v765 = vpop.xlane.xlu0 %764
    %v766 = vmul.f32 %v759, %v29
    %v767 = vmul.f32 %v762, %v29
    %v768 = vmul.f32 %v765, %v29
    %v769 = vadd.f32 %v766, 1e-05
    %v770 = vadd.f32 %v767, 1e-05
    %v771 = vadd.f32 %v768, 1e-05
    %v772 = vrsqrt.pop %v769
    %v773 = vrsqrt.pop %v770
    %v774 = vrsqrt.pop %v771
    %v775 = vmul.f32 %v751, %v772
    %v776 = vmul.f32 %v752, %v773
    %v777 = vmul.f32 %v753, %v774
    %v778 = vlaneseq
    %v779 = vshrl.u32 %v778, 7
    %v780 = vsub.s32 0, %v779
    %v781 = vrot.slane %v736, %v780
    %v782 = vmul.f32 %v775, %v781
    %v783 = vmul.f32 %v776, %v781
    %v784 = vmul.f32 %v777, %v781
    %v785 = vlaneseq
    %v786 = vshrl.u32 %v785, 7
    %v787 = vsub.s32 0, %v786
    %v788 = vrot.slane %v737, %v787
    %v789 = vadd.f32 %v782, %v788
    %v790 = vadd.f32 %v783, %v788
    %v791 = vadd.f32 %v784, %v788
    %v792 = vld [vmem:[%s2 + $0xf0] sm:$0xff]
    %v793 = vld [vmem:[%s2 + $0xf8] sm:$0xff]
    %v794 = vld [vmem:[%s2 + $0x100] sm:$0xff]
    %v795 = vld [vmem:[%s2 + $0x108] sm:$0xff]
    %v796 = vld [vmem:[%s2 + $0x110] sm:$0x1]
    %v797 = vld [vmem:[%s2 + $0x118] sm:$0xff]
    %v798 = vld [vmem:[%s2 + $0x120] sm:$0xff]
    %v799 = vld [vmem:[%s2 + $0x128] sm:$0xff]
    %v800 = vld [vmem:[%s2 + $0x130] sm:$0xff]
    %v801 = vld [vmem:[%s2 + $0x138] sm:$0x1]
    %v802 = vlaneseq
    %v803 = vshrl.u32 %v802, 7
    %v804 = vsub.s32 0, %v803
    %v805 = vrot.slane %v796, %v804
    %v807 = vsel %vm22, %v789, 0
    %v810 = vsel %vm22, %v790, 0
    %v813 = vsel %vm22, %v791, 0
    %815 = vmatprep.subr.mxu0 0.0
    %816 = vmatpush1.msra.mxu0 %v792
    %817 = vmatprep.subr.mxu0 0.0
    %818 = vmatpush1.msra.mxu0 %v793
    %819 = vmatprep.subr.mxu0 0.0
    %820 = vmatpush1.msra.mxu0 %v794
    %821 = vmatprep.subr.mxu0 0.0
    %822 = vmatpush1.msra.mxu0 %v795
    %823 = vmatprep.subr.mxu0 0.0
    %824 = vmatpush1.msra.mxu0 0.0
    %825 = vmatprep.subr.mxu0 0.0
    %826 = vmatpush1.msra.mxu0 0.0
    %827 = vmatprep.subr.mxu0 0.0
    %828 = vmatpush1.msra.mxu0 0.0
    %829 = vmatprep.subr.mxu0 0.0
    %830 = vmatpush1.msra.mxu0 0.0
    %831 = vmatprep.subr.mxu0 0.0
    %832 = vmatpush1.msra.mxu0 0.0
    %833 = vmatprep.subr.mxu0 0.0
    %834 = vmatpush1.msra.mxu0 0.0
    %835 = vmatprep.subr.mxu0 0.0
    %836 = vmatpush1.msra.mxu0 0.0
    %837 = vmatprep.subr.mxu0 0.0
    %838 = vmatpush1.msra.mxu0 0.0
    %839 = vmatprep.subr.mxu0 0.0
    %840 = vmatpush1.msra.mxu0 0.0
    %841 = vmatprep.subr.mxu0 0.0
    %842 = vmatpush1.msra.mxu0 0.0
    %843 = vmatprep.subr.mxu0 0.0
    %844 = vmatpush1.msra.mxu0 0.0
    %845 = vmatprep.subr.mxu0 0.0
    %846 = vmatpush1.msra.mxu0 0.0
    %847 = vmatprep.subr.mxu0 0.0
    %848 = vmatpush1.msra.mxu0 0.0
    %849 = vmatprep.subr.mxu0 0.0
    %850 = vmatpush1.msra.mxu0 0.0
    %851 = vmatprep.subr.mxu0 0.0
    %852 = vmatpush1.msra.mxu0 0.0
    %853 = vmatprep.subr.mxu0 0.0
    %854 = vmatpush1.msra.mxu0 0.0
    %855 = vmatprep.subr.mxu0 0.0
    %856 = vmatpush1.msra.mxu0 0.0
    %857 = vmatprep.subr.mxu0 0.0
    %858 = vmatpush1.msra.mxu0 0.0
    %859 = vmatprep.subr.mxu0 0.0
    %860 = vmatpush1.msra.mxu0 0.0
    %861 = vmatprep.subr.mxu0 0.0
    %862 = vmatpush1.msra.mxu0 0.0
    %863 = vmatprep.subr.mxu0 0.0
    %864 = vmatpush1.msra.mxu0 0.0
    %865 = vmatprep.subr.mxu0 0.0
    %866 = vmatpush1.msra.mxu0 0.0
    %867 = vmatprep.subr.mxu0 0.0
    %868 = vmatpush1.msra.mxu0 0.0
    %869 = vmatprep.subr.mxu0 0.0
    %870 = vmatpush1.msra.mxu0 0.0
    %871 = vmatprep.subr.mxu0 0.0
    %872 = vmatpush1.msra.mxu0 0.0
    %873 = vmatprep.subr.mxu0 0.0
    %874 = vmatpush1.msra.mxu0 0.0
    %875 = vmatprep.subr.mxu0 0.0
    %876 = vmatpush1.msra.mxu0 0.0
    %877 = vmatprep.subr.mxu0 0.0
    %878 = vmatpush1.msra.mxu0 0.0
    %879 = vmatprep.mubr.f32.mxu0 0.0
    %880 = vmatmul.mubr.f32.gmra.mrb[0].mxu0 %v807
    %v881 = vpop.f32.mrb[0].mxu0
    %v882 = vadd.f32 %v805, %v881
    %v883 = vpop.f32.mrb[0].mxu0
    %884 = vmatprep.mubr.f32.mxu0 0.0
    %885 = vmatmul.mubr.f32.gmra.mrb[0].mxu0 %v810
    %v886 = vpop.f32.mrb[0].mxu0
    %v887 = vadd.f32 %v805, %v886
    %v888 = vpop.f32.mrb[0].mxu0
    %889 = vmatprep.mubr.f32.mxu0 0.0
    %890 = vmatmul.mubr.f32.gmra.mrb[0].mxu0 %v813
    %v891 = vpop.f32.mrb[0].mxu0
    %v892 = vadd.f32 %v805, %v891
    %v893 = vpop.f32.mrb[0].mxu0
    %894 = vdwg.mxu0
    %v895 = vsub.f32 0.0, %v882
    %v896 = vsub.f32 0.0, %v887
    %v897 = vsub.f32 0.0, %v892
    %v898 = vmul.f32 %v895, 1.442695
    %v899 = vpow.pop %v898
    %v900 = vmul.f32 %v896, 1.442695
    %v901 = vpow.pop %v900
    %v902 = vmul.f32 %v897, 1.442695
    %v903 = vpow.pop %v902
    %v904 = vadd.f32 %v899, 1.0
    %v905 = vadd.f32 %v901, 1.0
    %v906 = vadd.f32 %v903, 1.0
    %v907 = vrcp.pop %v904
    %v908 = vrcp.pop %v905
    %v909 = vrcp.pop %v906
    %v910 = vmul.f32 %v882, %v907
    %v911 = vmul.f32 %v887, %v908
    %v912 = vmul.f32 %v892, %v909
    %v913 = vlaneseq
    %v914 = vshrl.u32 %v913, 7
    %v915 = vsub.s32 0, %v914
    %v916 = vrot.slane %v801, %v915
    %v918 = vsel %vm22, %v910, 0
    %v921 = vsel %vm22, %v911, 0
    %v924 = vsel %vm22, %v912, 0
    %926 = vmatprep.subr.mxu0 0.0
    %927 = vmatpush1.msra.mxu0 %v797
    %928 = vmatprep.subr.mxu0 0.0
    %929 = vmatpush1.msra.mxu0 %v798
    %930 = vmatprep.subr.mxu0 0.0
    %931 = vmatpush1.msra.mxu0 %v799
    %932 = vmatprep.subr.mxu0 0.0
    %933 = vmatpush1.msra.mxu0 %v800
    %934 = vmatprep.subr.mxu0 0.0
    %935 = vmatpush1.msra.mxu0 0.0
    %936 = vmatprep.subr.mxu0 0.0
    %937 = vmatpush1.msra.mxu0 0.0
    %938 = vmatprep.subr.mxu0 0.0
    %939 = vmatpush1.msra.mxu0 0.0
    %940 = vmatprep.subr.mxu0 0.0
    %941 = vmatpush1.msra.mxu0 0.0
    %942 = vmatprep.subr.mxu0 0.0
    %943 = vmatpush1.msra.mxu0 0.0
    %944 = vmatprep.subr.mxu0 0.0
    %945 = vmatpush1.msra.mxu0 0.0
    %946 = vmatprep.subr.mxu0 0.0
    %947 = vmatpush1.msra.mxu0 0.0
    %948 = vmatprep.subr.mxu0 0.0
    %949 = vmatpush1.msra.mxu0 0.0
    %950 = vmatprep.subr.mxu0 0.0
    %951 = vmatpush1.msra.mxu0 0.0
    %952 = vmatprep.subr.mxu0 0.0
    %953 = vmatpush1.msra.mxu0 0.0
    %954 = vmatprep.subr.mxu0 0.0
    %955 = vmatpush1.msra.mxu0 0.0
    %956 = vmatprep.subr.mxu0 0.0
    %957 = vmatpush1.msra.mxu0 0.0
    %958 = vmatprep.subr.mxu0 0.0
    %959 = vmatpush1.msra.mxu0 0.0
    %960 = vmatprep.subr.mxu0 0.0
    %961 = vmatpush1.msra.mxu0 0.0
    %962 = vmatprep.subr.mxu0 0.0
    %963 = vmatpush1.msra.mxu0 0.0
    %964 = vmatprep.subr.mxu0 0.0
    %965 = vmatpush1.msra.mxu0 0.0
    %966 = vmatprep.subr.mxu0 0.0
    %967 = vmatpush1.msra.mxu0 0.0
    %968 = vmatprep.subr.mxu0 0.0
    %969 = vmatpush1.msra.mxu0 0.0
    %970 = vmatprep.subr.mxu0 0.0
    %971 = vmatpush1.msra.mxu0 0.0
    %972 = vmatprep.subr.mxu0 0.0
    %973 = vmatpush1.msra.mxu0 0.0
    %974 = vmatprep.subr.mxu0 0.0
    %975 = vmatpush1.msra.mxu0 0.0
    %976 = vmatprep.subr.mxu0 0.0
    %977 = vmatpush1.msra.mxu0 0.0
    %978 = vmatprep.subr.mxu0 0.0
    %979 = vmatpush1.msra.mxu0 0.0
    %980 = vmatprep.subr.mxu0 0.0
    %981 = vmatpush1.msra.mxu0 0.0
    %982 = vmatprep.subr.mxu0 0.0
    %983 = vmatpush1.msra.mxu0 0.0
    %984 = vmatprep.subr.mxu0 0.0
    %985 = vmatpush1.msra.mxu0 0.0
    %986 = vmatprep.subr.mxu0 0.0
    %987 = vmatpush1.msra.mxu0 0.0
    %988 = vmatprep.subr.mxu0 0.0
    %989 = vmatpush1.msra.mxu0 0.0
    %990 = vmatprep.mubr.f32.mxu0 0.0
    %991 = vmatmul.mubr.f32.gmra.mrb[0].mxu0 %v918
    %v992 = vpop.f32.mrb[0].mxu0
    %v993 = vadd.f32 %v916, %v992
    %v994 = vpop.f32.mrb[0].mxu0
    %995 = vmatprep.mubr.f32.mxu0 0.0
    %996 = vmatmul.mubr.f32.gmra.mrb[0].mxu0 %v921
    %v997 = vpop.f32.mrb[0].mxu0
    %v998 = vadd.f32 %v916, %v997
    %v999 = vpop.f32.mrb[0].mxu0
    %1000 = vmatprep.mubr.f32.mxu0 0.0
    %1001 = vmatmul.mubr.f32.gmra.mrb[0].mxu0 %v924
    %v1002 = vpop.f32.mrb[0].mxu0
    %v1003 = vadd.f32 %v916, %v1002
    %v1004 = vpop.f32.mrb[0].mxu0
    %1005 = vdwg.mxu0
    %1006 = vxpose.xlu0.b32.start [1/16] %v993, 128
    %1007 = vxpose.xlu0.b32.cont [2/16] %v998, 128
    %1008 = vxpose.xlu0.b32.cont [3/16] %v1003, 128
    %1009 = vxpose.xlu0.b32.cont [4/16] 0.0, 128
    %1010 = vxpose.xlu0.b32.cont [5/16] 0.0, 128
    %1011 = vxpose.xlu0.b32.cont [6/16] 0.0, 128
    %1012 = vxpose.xlu0.b32.cont [7/16] 0.0, 128
    %1013 = vxpose.xlu0.b32.cont [8/16] 0.0, 128
    %1014 = vxpose.xlu0.b32.cont [9/16] 0.0, 128
    %1015 = vxpose.xlu0.b32.cont [10/16] 0.0, 128
    %1016 = vxpose.xlu0.b32.cont [11/16] 0.0, 128
    %1017 = vxpose.xlu0.b32.cont [12/16] 0.0, 128
    %1018 = vxpose.xlu0.b32.cont [13/16] 0.0, 128
    %1019 = vxpose.xlu0.b32.cont [14/16] 0.0, 128
    %1020 = vxpose.xlu0.b32.cont [15/16] 0.0, 128
    %1021 = vxpose.xlu0.b32.end [16/16] 0.0, 128
    %v1022 = vpop.trf.xlu0
    %v1023 = vpop.trf.xlu0
    %v1024 = vpop.trf.xlu0
    %v1025 = vpop.trf.xlu0
    %v1026 = vpop.trf.xlu0
    %v1027 = vpop.trf.xlu0
    %v1028 = vpop.trf.xlu0
    %v1029 = vpop.trf.xlu0
    %v1030 = vpop.trf.xlu0
    %v1031 = vpop.trf.xlu0
    %v1032 = vpop.trf.xlu0
    %v1033 = vpop.trf.xlu0
    %v1034 = vpop.trf.xlu0
    %v1035 = vpop.trf.xlu0
    %v1036 = vpop.trf.xlu0
    %v1037 = vpop.trf.xlu0
    %v1038 = vld [vmem:[%s2 + $0x140] sm:$0xff]
    %v1039 = vld [vmem:[%s2 + $0x148] sm:$0xff]
    %v1040 = vld [vmem:[%s2 + $0x150] sm:$0x3]
    %v1041 = vld [vmem:[%s2 + $0x158] sm:$0x1]
    %v1042 = vlaneseq
    %v1043 = vshrl.u32 %v1042, 7
    %v1044 = vsub.s32 0, %v1043
    %v1045 = vrot.slane %v1041, %v1044
    %vm1046 = vcmask 146432
    %v1048 = vsel %vm1046, %v1022, 0
    %v1051 = vsel %vm1046, %v1023, 0
    %v1054 = vsel %vm1046, %v1024, 0
    %v1057 = vsel %vm1046, %v1025, 0
    %vm1059 = vcmask 1041408
    %v1061 = vsel %vm1059, %v1040, 0
    %1063 = vmatprep.subr.mxu0 0.0
    %1064 = vmatpush1.msra.mxu0 %v1038
    %1065 = vmatprep.subr.mxu0 0.0
    %1066 = vmatpush1.msra.mxu0 %v1039
    %1067 = vmatprep.subr.mxu0 0.0
    %1068 = vmatpush1.msra.mxu0 %v1061
    %1069 = vmatprep.subr.mxu0 0.0
    %1070 = vmatpush1.msra.mxu0 0.0
    %1071 = vmatprep.subr.mxu0 0.0
    %1072 = vmatpush1.msra.mxu0 0.0
    %1073 = vmatprep.subr.mxu0 0.0
    %1074 = vmatpush1.msra.mxu0 0.0
    %1075 = vmatprep.subr.mxu0 0.0
    %1076 = vmatpush1.msra.mxu0 0.0
    %1077 = vmatprep.subr.mxu0 0.0
    %1078 = vmatpush1.msra.mxu0 0.0
    %1079 = vmatprep.subr.mxu0 0.0
    %1080 = vmatpush1.msra.mxu0 0.0
    %1081 = vmatprep.subr.mxu0 0.0
    %1082 = vmatpush1.msra.mxu0 0.0
    %1083 = vmatprep.subr.mxu0 0.0
    %1084 = vmatpush1.msra.mxu0 0.0
    %1085 = vmatprep.subr.mxu0 0.0
    %1086 = vmatpush1.msra.mxu0 0.0
    %1087 = vmatprep.subr.mxu0 0.0
    %1088 = vmatpush1.msra.mxu0 0.0
    %1089 = vmatprep.subr.mxu0 0.0
    %1090 = vmatpush1.msra.mxu0 0.0
    %1091 = vmatprep.subr.mxu0 0.0
    %1092 = vmatpush1.msra.mxu0 0.0
    %1093 = vmatprep.subr.mxu0 0.0
    %1094 = vmatpush1.msra.mxu0 0.0
    %1095 = vmatprep.subr.mxu0 0.0
    %1096 = vmatpush1.msra.mxu0 0.0
    %1097 = vmatprep.subr.mxu0 0.0
    %1098 = vmatpush1.msra.mxu0 0.0
    %1099 = vmatprep.subr.mxu0 0.0
    %1100 = vmatpush1.msra.mxu0 0.0
    %1101 = vmatprep.subr.mxu0 0.0
    %1102 = vmatpush1.msra.mxu0 0.0
    %1103 = vmatprep.subr.mxu0 0.0
    %1104 = vmatpush1.msra.mxu0 0.0
    %1105 = vmatprep.subr.mxu0 0.0
    %1106 = vmatpush1.msra.mxu0 0.0
    %1107 = vmatprep.subr.mxu0 0.0
    %1108 = vmatpush1.msra.mxu0 0.0
    %1109 = vmatprep.subr.mxu0 0.0
    %1110 = vmatpush1.msra.mxu0 0.0
    %1111 = vmatprep.subr.mxu0 0.0
    %1112 = vmatpush1.msra.mxu0 0.0
    %1113 = vmatprep.subr.mxu0 0.0
    %1114 = vmatpush1.msra.mxu0 0.0
    %1115 = vmatprep.subr.mxu0 0.0
    %1116 = vmatpush1.msra.mxu0 0.0
    %1117 = vmatprep.subr.mxu0 0.0
    %1118 = vmatpush1.msra.mxu0 0.0
    %1119 = vmatprep.subr.mxu0 0.0
    %1120 = vmatpush1.msra.mxu0 0.0
    %1121 = vmatprep.subr.mxu0 0.0
    %1122 = vmatpush1.msra.mxu0 0.0
    %1123 = vmatprep.subr.mxu0 0.0
    %1124 = vmatpush1.msra.mxu0 0.0
    %1125 = vmatprep.subr.mxu0 0.0
    %1126 = vmatpush1.msra.mxu0 0.0
    %1127 = vmatprep.mubr.f32.mxu0 0.0
    %1128 = vmatmul.mubr.f32.gmra.mrb[0].mxu0 %v1048
    %v1129 = vpop.f32.mrb[0].mxu0
    %v1130 = vadd.f32 %v1045, %v1129
    %v1131 = vpop.f32.mrb[0].mxu0
    %1132 = vmatprep.mubr.f32.mxu0 0.0
    %1133 = vmatmul.mubr.f32.gmra.mrb[0].mxu0 %v1051
    %v1134 = vpop.f32.mrb[0].mxu0
    %v1135 = vadd.f32 %v1045, %v1134
    %v1136 = vpop.f32.mrb[0].mxu0
    %1137 = vmatprep.mubr.f32.mxu0 0.0
    %1138 = vmatmul.mubr.f32.gmra.mrb[0].mxu0 %v1054
    %v1139 = vpop.f32.mrb[0].mxu0
    %v1140 = vadd.f32 %v1045, %v1139
    %v1141 = vpop.f32.mrb[0].mxu0
    %1142 = vmatprep.mubr.f32.mxu0 0.0
    %1143 = vmatmul.mubr.f32.gmra.mrb[0].mxu0 %v1057
    %v1144 = vpop.f32.mrb[0].mxu0
    %v1145 = vadd.f32 %v1045, %v1144
    %v1146 = vpop.f32.mrb[0].mxu0
    %1147 = vdwg.mxu0
    %v1148 = vsub.f32 0.0, %v1130
    %v1149 = vsub.f32 0.0, %v1135
    %v1150 = vsub.f32 0.0, %v1140
    %v1151 = vsub.f32 0.0, %v1145
    %v1152 = vmul.f32 %v1148, 1.442695
    %v1153 = vpow.pop %v1152
    %v1154 = vmul.f32 %v1149, 1.442695
    %v1155 = vpow.pop %v1154
    %v1156 = vmul.f32 %v1150, 1.442695
    %v1157 = vpow.pop %v1156
    %v1158 = vmul.f32 %v1151, 1.442695
    %v1159 = vpow.pop %v1158
    %v1160 = vadd.f32 %v1153, 1.0
    %v1161 = vadd.f32 %v1155, 1.0
    %v1162 = vadd.f32 %v1157, 1.0
    %v1163 = vadd.f32 %v1159, 1.0
    %v1164 = vrcp.pop %v1160
    %v1165 = vrcp.pop %v1161
    %v1166 = vrcp.pop %v1162
    %v1167 = vrcp.pop %v1163
    %v1168 = vmul.f32 %v1130, %v1164
    %v1169 = vmul.f32 %v1135, %v1165
    %v1170 = vmul.f32 %v1140, %v1166
    %v1171 = vmul.f32 %v1145, %v1167
    %v1172 = vld [vmem:[%s2 + $0x160] sm:$0xff]
    %v1173 = vld [vmem:[%s2 + $0x168] sm:$0xff]
    %v1174 = vld [vmem:[%s2 + $0x170] sm:$0xff]
    %v1175 = vld [vmem:[%s2 + $0x178] sm:$0xff]
    %v1176 = vld [vmem:[%s2 + $0x180] sm:$0x1]
    %v1177 = vlaneseq
    %v1178 = vshrl.u32 %v1177, 7
    %v1179 = vsub.s32 0, %v1178
    %v1180 = vrot.slane %v1176, %v1179
    %v1182 = vsel %vm22, %v1168, 0
    %v1185 = vsel %vm22, %v1169, 0
    %v1188 = vsel %vm22, %v1170, 0
    %v1191 = vsel %vm22, %v1171, 0
    %1193 = vmatprep.subr.mxu0 0.0
    %1194 = vmatpush1.msra.mxu0 %v1172
    %1195 = vmatprep.subr.mxu0 0.0
    %1196 = vmatpush1.msra.mxu0 %v1173
    %1197 = vmatprep.subr.mxu0 0.0
    %1198 = vmatpush1.msra.mxu0 %v1174
    %1199 = vmatprep.subr.mxu0 0.0
    %1200 = vmatpush1.msra.mxu0 %v1175
    %1201 = vmatprep.subr.mxu0 0.0
    %1202 = vmatpush1.msra.mxu0 0.0
    %1203 = vmatprep.subr.mxu0 0.0
    %1204 = vmatpush1.msra.mxu0 0.0
    %1205 = vmatprep.subr.mxu0 0.0
    %1206 = vmatpush1.msra.mxu0 0.0
    %1207 = vmatprep.subr.mxu0 0.0
    %1208 = vmatpush1.msra.mxu0 0.0
    %1209 = vmatprep.subr.mxu0 0.0
    %1210 = vmatpush1.msra.mxu0 0.0
    %1211 = vmatprep.subr.mxu0 0.0
    %1212 = vmatpush1.msra.mxu0 0.0
    %1213 = vmatprep.subr.mxu0 0.0
    %1214 = vmatpush1.msra.mxu0 0.0
    %1215 = vmatprep.subr.mxu0 0.0
    %1216 = vmatpush1.msra.mxu0 0.0
    %1217 = vmatprep.subr.mxu0 0.0
    %1218 = vmatpush1.msra.mxu0 0.0
    %1219 = vmatprep.subr.mxu0 0.0
    %1220 = vmatpush1.msra.mxu0 0.0
    %1221 = vmatprep.subr.mxu0 0.0
    %1222 = vmatpush1.msra.mxu0 0.0
    %1223 = vmatprep.subr.mxu0 0.0
    %1224 = vmatpush1.msra.mxu0 0.0
    %1225 = vmatprep.subr.mxu0 0.0
    %1226 = vmatpush1.msra.mxu0 0.0
    %1227 = vmatprep.subr.mxu0 0.0
    %1228 = vmatpush1.msra.mxu0 0.0
    %1229 = vmatprep.subr.mxu0 0.0
    %1230 = vmatpush1.msra.mxu0 0.0
    %1231 = vmatprep.subr.mxu0 0.0
    %1232 = vmatpush1.msra.mxu0 0.0
    %1233 = vmatprep.subr.mxu0 0.0
    %1234 = vmatpush1.msra.mxu0 0.0
    %1235 = vmatprep.subr.mxu0 0.0
    %1236 = vmatpush1.msra.mxu0 0.0
    %1237 = vmatprep.subr.mxu0 0.0
    %1238 = vmatpush1.msra.mxu0 0.0
    %1239 = vmatprep.subr.mxu0 0.0
    %1240 = vmatpush1.msra.mxu0 0.0
    %1241 = vmatprep.subr.mxu0 0.0
    %1242 = vmatpush1.msra.mxu0 0.0
    %1243 = vmatprep.subr.mxu0 0.0
    %1244 = vmatpush1.msra.mxu0 0.0
    %1245 = vmatprep.subr.mxu0 0.0
    %1246 = vmatpush1.msra.mxu0 0.0
    %1247 = vmatprep.subr.mxu0 0.0
    %1248 = vmatpush1.msra.mxu0 0.0
    %1249 = vmatprep.subr.mxu0 0.0
    %1250 = vmatpush1.msra.mxu0 0.0
    %1251 = vmatprep.subr.mxu0 0.0
    %1252 = vmatpush1.msra.mxu0 0.0
    %1253 = vmatprep.subr.mxu0 0.0
    %1254 = vmatpush1.msra.mxu0 0.0
    %1255 = vmatprep.subr.mxu0 0.0
    %1256 = vmatpush1.msra.mxu0 0.0
    %1257 = vmatprep.mubr.f32.mxu0 0.0
    %1258 = vmatmul.mubr.f32.gmra.mrb[0].mxu0 %v1182
    %v1259 = vpop.f32.mrb[0].mxu0
    %v1260 = vadd.f32 %v1180, %v1259
    %v1261 = vpop.f32.mrb[0].mxu0
    %1262 = vmatprep.mubr.f32.mxu0 0.0
    %1263 = vmatmul.mubr.f32.gmra.mrb[0].mxu0 %v1185
    %v1264 = vpop.f32.mrb[0].mxu0
    %v1265 = vadd.f32 %v1180, %v1264
    %v1266 = vpop.f32.mrb[0].mxu0
    %1267 = vmatprep.mubr.f32.mxu0 0.0
    %1268 = vmatmul.mubr.f32.gmra.mrb[0].mxu0 %v1188
    %v1269 = vpop.f32.mrb[0].mxu0
    %v1270 = vadd.f32 %v1180, %v1269
    %v1271 = vpop.f32.mrb[0].mxu0
    %1272 = vmatprep.mubr.f32.mxu0 0.0
    %1273 = vmatmul.mubr.f32.gmra.mrb[0].mxu0 %v1191
    %v1274 = vpop.f32.mrb[0].mxu0
    %v1275 = vadd.f32 %v1180, %v1274
    %v1276 = vpop.f32.mrb[0].mxu0
    %1277 = vdwg.mxu0
    %1278 = vxpose.xlu0.b32.start [1/16] %v1260, 128
    %1279 = vxpose.xlu0.b32.cont [2/16] %v1265, 128
    %1280 = vxpose.xlu0.b32.cont [3/16] %v1270, 128
    %1281 = vxpose.xlu0.b32.cont [4/16] %v1275, 128
    %1282 = vxpose.xlu0.b32.cont [5/16] 0.0, 128
    %1283 = vxpose.xlu0.b32.cont [6/16] 0.0, 128
    %1284 = vxpose.xlu0.b32.cont [7/16] 0.0, 128
    %1285 = vxpose.xlu0.b32.cont [8/16] 0.0, 128
    %1286 = vxpose.xlu0.b32.cont [9/16] 0.0, 128
    %1287 = vxpose.xlu0.b32.cont [10/16] 0.0, 128
    %1288 = vxpose.xlu0.b32.cont [11/16] 0.0, 128
    %1289 = vxpose.xlu0.b32.cont [12/16] 0.0, 128
    %1290 = vxpose.xlu0.b32.cont [13/16] 0.0, 128
    %1291 = vxpose.xlu0.b32.cont [14/16] 0.0, 128
    %1292 = vxpose.xlu0.b32.cont [15/16] 0.0, 128
    %1293 = vxpose.xlu0.b32.end [16/16] 0.0, 128
    %v1294 = vpop.trf.xlu0
    %v1295 = vpop.trf.xlu0
    %v1296 = vpop.trf.xlu0
    %v1297 = vpop.trf.xlu0
    %v1298 = vpop.trf.xlu0
    %v1299 = vpop.trf.xlu0
    %v1300 = vpop.trf.xlu0
    %v1301 = vpop.trf.xlu0
    %v1302 = vpop.trf.xlu0
    %v1303 = vpop.trf.xlu0
    %v1304 = vpop.trf.xlu0
    %v1305 = vpop.trf.xlu0
    %v1306 = vpop.trf.xlu0
    %v1307 = vpop.trf.xlu0
    %v1308 = vpop.trf.xlu0
    %v1309 = vpop.trf.xlu0
    %v1310 = vadd.f32 %v1294, %v733
    %v1311 = vadd.f32 %v1295, %v734
    %v1312 = vadd.f32 %v1296, %v735
    %1313 = vst.msk [vmem:[#allocation2] sm:$0xff] %vm22, %v1310
    %1314 = vst.msk [vmem:[#allocation2 + $0x8] sm:$0xff] %vm22, %v1311
    %1315 = vst.msk [vmem:[#allocation2 + $0x10] sm:$0x3] %vm744, %v1312
    // Predicated region
    $region14: #{tpu_custom_call.1} parent=1 // pred_check
      _
    $region15: #{tpu_custom_call.1} parent=1 // pred_check_branch
      %1317 = sbr.rel (0) target = $region17
    $region16: #{tpu_custom_call.1} parent=1 // pred_region
      %s1319 = ssub.s32 384, 384
      %1320 = vsyncadd [#allocation3], %s1319
      %s1321 = sshll.u32 [#allocation2], 4
      %s1322 = int_to_ptr.vmem [resolvable:$true] %s1321
      %1327 = dma.vmem_to_hbm [thread:$0]  %s1322, 384, %s3, [#allocation3], 128, 128, 8
    $region17: #{tpu_custom_call.1} parent=1 // pred_fallthru
      _
    // Predicated region
    $region18: #{tpu_custom_call.1} parent=1 // pred_check
      _
    $region19: #{tpu_custom_call.1} parent=1 // pred_check_branch
      %1329 = sbr.rel (0) target = $region21
    $region20: #{tpu_custom_call.1} parent=1 // pred_region
      %s1331 = ssub.s32 256, 256
      %1332 = vsyncadd [#allocation5], %s1331
      %s1333 = sshll.u32 [#allocation4], 4
      %s1334 = int_to_ptr.vmem [resolvable:$true] %s1333
      %1339 = dma.vmem_to_hbm [thread:$0]  %s1334, 256, %s4, [#allocation5], 128, 128, 8
    $region21: #{tpu_custom_call.1} parent=1 // pred_fallthru
      _
    // Predicated region
    $region22: #{tpu_custom_call.1} parent=1 // pred_check
      _
    $region23: #{tpu_custom_call.1} parent=1 // pred_check_branch
      %1341 = sbr.rel (0) target = $region25
    $region24: #{tpu_custom_call.1} parent=1 // pred_region
      %1342 = dma.done [#allocation3], 384
    $region25: #{tpu_custom_call.1} parent=1 // pred_fallthru
      _
    // Predicated region
    $region26: #{tpu_custom_call.1} parent=1 // pred_check
      _
    $region27: #{tpu_custom_call.1} parent=1 // pred_check_branch
      %1344 = sbr.rel (0) target = $region29
    $region28: #{tpu_custom_call.1} parent=1 // pred_region
      %1345 = dma.done [#allocation5], 256
    $region29: #{tpu_custom_call.1} parent=1 // pred_fallthru
      _
    %1346 = vsyncpa [#allocation3], 1
    %1347 = vsyncpa [#allocation5], 1

</llo_original>
